<compile_context>
chip_gen: v6e
topology: v6e:2x2x1
jax: 0.10.0
libtpu: 0.0.40
codegen_flags: <defaults>
</compile_context>

<pallas_src>
import functools

import jax
import jax.numpy as jnp
from jax import lax
from jax.experimental import pallas as pl
from jax.experimental.pallas import tpu as pltpu


# ---------------------------------------------------------------------------
# Pallas kernel: one batch *tile* (TB samples) per grid step.
# ---------------------------------------------------------------------------
def _gnn_pred_kernel(x_ref, wqkv_ref, bqkv_ref, w1_ref, b1_ref,
                     ln_g_ref, ln_b_ref, w2_ref, b2_ref, o_ref,
                     *, mm_dtype):
    TB, N, Cin = x_ref.shape
    W3 = wqkv_ref.shape[1]
    W = W3 // 3
    R = TB * N

    # (TB, N, Cin) -> (TB*N, Cin): leading-dim merge (N == 8 sublane tile, free).
    x = x_ref[...].reshape(R, Cin).astype(mm_dtype)

    # ---- SelfAttentionLayer ----
    # Fused Q|K|V projection: one MXU matmul, lane-dense 3W-wide output.
    qkv = jnp.dot(x, wqkv_ref[...].astype(mm_dtype),
                  preferred_element_type=jnp.float32) + bqkv_ref[...]
    q = qkv[:, 0 * W:1 * W].reshape(TB, N, W).astype(mm_dtype)
    k = qkv[:, 1 * W:2 * W].reshape(TB, N, W).astype(mm_dtype)
    v = qkv[:, 2 * W:3 * W].reshape(TB, N, W).astype(mm_dtype)

    # scores[b] = q[b] @ k[b]^T, batched over TB, no transpose materialized.
    scores = jnp.einsum("bqd,bkd->bqk", q, k,
                        preferred_element_type=jnp.float32)        # (TB, N, N)

    # softmax(dim=-1); reciprocal goes to the (otherwise idle) EUP slot.
    m = jnp.max(scores, axis=-1, keepdims=True)
    e = jnp.exp(scores - m)
    denom = jnp.sum(e, axis=-1, keepdims=True)
    attn = e * pl.reciprocal(denom, approx=True)

    out = jnp.einsum("bqk,bkd->bqd", attn.astype(mm_dtype), v,
                     preferred_element_type=jnp.float32)            # (TB, N, W)
    out = out.reshape(R, W)                                         # free merge

    # ---- TrajPredMLP: Linear -> LayerNorm -> ReLU -> Linear ----
    h = jnp.dot(out.astype(mm_dtype), w1_ref[...].astype(mm_dtype),
                preferred_element_type=jnp.float32) + b1_ref[...]
    mu = jnp.mean(h, axis=-1, keepdims=True)
    diff = h - mu
    var = jnp.mean(diff * diff, axis=-1, keepdims=True)             # biased, like torch LN
    hn = diff * lax.rsqrt(var + 1e-5)
    hn = hn * ln_g_ref[...] + ln_b_ref[...]
    hr = jnp.maximum(hn, 0.0)
    y = jnp.dot(hr.astype(mm_dtype), w2_ref[...].astype(mm_dtype),
                preferred_element_type=jnp.float32) + b2_ref[...]

    o_ref[...] = y.reshape(o_ref.shape).astype(o_ref.dtype)


# ---------------------------------------------------------------------------
# Wrapper
# ---------------------------------------------------------------------------
def _pick_block_b(batch, nodes, target_rows=256):
    """Largest divisor of `batch` with tb*nodes close to `target_rows` MXU rows."""
    tb = max(1, min(batch, target_rows // max(nodes, 1)))
    while batch % tb:
        tb -= 1
    return tb


def gnn_prediction_forward(obs, params, *, block_b=None, use_bf16_matmul=False):
    B, N, Cin = obs.shape
    W = params["wq"].shape[1]
    Hm = params["w1"].shape[1]
    Cout = params["w2"].shape[1]

    # Fuse the three projection weights/biases into one matmul operand.
    wqkv = jnp.concatenate([params["wq"], params["wk"], params["wv"]], axis=1)
    bqkv = jnp.concatenate([params["bq"], params["bk"], params["bv"]], axis=1)

    mm_dtype = jnp.bfloat16 if use_bf16_matmul else jnp.float32
    if use_bf16_matmul:
        # bf16 MXU operands (accumulation / softmax / LayerNorm stay f32).
        obs = obs.astype(jnp.bfloat16)
        wqkv = wqkv.astype(jnp.bfloat16)
        w1 = params["w1"].astype(jnp.bfloat16)
        w2 = params["w2"].astype(jnp.bfloat16)
    else:
        w1, w2 = params["w1"], params["w2"]

    tb = block_b if block_b is not None else _pick_block_b(B, N)
    assert B % tb == 0, "block_b must divide the batch size"
    n_blocks = B // tb

    def const2(shape):
        # Whole (untiled) parameter; constant index_map -> block stays resident
        # across the grid, no per-step re-DMA.
        return pl.BlockSpec(shape, lambda b: (0, 0))

    in_specs = [
        pl.BlockSpec((tb, N, Cin), lambda b: (b, 0, 0)),   # obs batch tile
        const2((Cin, 3 * W)), const2((1, 3 * W)),          # fused q|k|v linear
        const2((W, Hm)), const2((1, Hm)),                  # mlp linear 1
        const2((1, Hm)), const2((1, Hm)),                  # layernorm gamma/beta
        const2((Hm, Cout)), const2((1, Cout)),             # mlp linear 2
    ]
    out_spec = pl.BlockSpec((tb, N, Cout), lambda b: (b, 0, 0))

    kernel = functools.partial(_gnn_pred_kernel, mm_dtype=mm_dtype)
    return pl.pallas_call(
        kernel,
        out_shape=jax.ShapeDtypeStruct((B, N, Cout), jnp.float32),
        grid=(n_blocks,),
        in_specs=in_specs,
        out_specs=out_spec,
        compiler_params=pltpu.CompilerParams(dimension_semantics=("parallel",)),
    )(obs, wqkv, bqkv, w1, params["b1"], params["ln_g"], params["ln_b"],
      w2, params["b2"])


# ---------------------------------------------------------------------------
# Pure-JAX reference (mirrors the PyTorch forward) for verification.
# ---------------------------------------------------------------------------
def reference_forward(obs, p):
    q = obs @ p["wq"] + p["bq"]
    k = obs @ p["wk"] + p["bk"]
    v = obs @ p["wv"] + p["bv"]
    scores = jnp.einsum("bnd,bmd->bnm", q, k)
    attn = jax.nn.softmax(scores, axis=-1)
    out = jnp.einsum("bnm,bmd->bnd", attn, v)
    h = out @ p["w1"] + p["b1"]
    mu = jnp.mean(h, axis=-1, keepdims=True)
    var = jnp.mean((h - mu) ** 2, axis=-1, keepdims=True)
    hn = (h - mu) / jnp.sqrt(var + 1e-5) * p["ln_g"] + p["ln_b"]
    hr = jnp.maximum(hn, 0.0)
    return hr @ p["w2"] + p["b2"]


# ---------------------------------------------------------------------------
# Deterministic parameter init (PyTorch nn.Linear default: U(-1/sqrt(fan_in), ..))
# ---------------------------------------------------------------------------
def init_params(key, in_channels, out_channels, global_graph_width, mlp_width):
    keys = jax.random.split(key, 10)

    def linear(kw, kb, fan_in, fan_out):
        bound = 1.0 / jnp.sqrt(fan_in)
        w = jax.random.uniform(kw, (fan_in, fan_out), jnp.float32, -bound, bound)
        b = jax.random.uniform(kb, (1, fan_out), jnp.float32, -bound, bound)
        return w, b

    wq, bq = linear(keys[0], keys[1], in_channels, global_graph_width)
    wk, bk = linear(keys[2], keys[3], in_channels, global_graph_width)
    wv, bv = linear(keys[4], keys[5], in_channels, global_graph_width)
    w1, b1 = linear(keys[6], keys[7], global_graph_width, mlp_width)
    w2, b2 = linear(keys[8], keys[9], mlp_width, out_channels)
    return {
        "wq": wq, "bq": bq, "wk": wk, "bk": bk, "wv": wv, "bv": bv,
        "w1": w1, "b1": b1,
        "ln_g": jnp.ones((1, mlp_width), jnp.float32),
        "ln_b": jnp.zeros((1, mlp_width), jnp.float32),
        "w2": w2, "b2": b2,
    }


if __name__ == "__main__":
    # Shapes consistent with the module defaults:
    #   in_channels=16, out_channels=4, global_graph_width=64, traj_pred_mlp_width=64
    #   obs: (batch, polyline nodes, in_channels); use_gaussion=False.
    # TODO(synk): TrajPredGaussion (use_gaussion=True) sigma head not implemented;
    # its class definition is not part of the provided module source.
    B, N, CIN, COUT, W, HM = 8, 8, 16, 4, 64, 64

    key = jax.random.PRNGKey(0)
    k_obs, k_par = jax.random.split(key)
    obs = jax.random.normal(k_obs, (B, N, CIN), jnp.float32)
    params = init_params(k_par, CIN, COUT, W, HM)

    ref = reference_forward(obs, params)

    # f32 MXU path (default): batch-tiled grid, fused QKV, batched attention.
    # Tolerance covers the EUP approx-reciprocal in the softmax denominator.
    pred = gnn_prediction_forward(obs, params)
    jax.block_until_ready(pred)
    assert pred.shape == (B, N, COUT)
    assert jnp.allclose(pred, ref, atol=5e-3, rtol=5e-3), "f32 kernel mismatch vs reference"

    # bf16 MXU path (recommended on v6e/v7x), smaller batch tile so the grid
    # has multiple parallel blocks (keeps both v7x TensorCores busy).
    pred_bf16 = gnn_prediction_forward(obs, params, block_b=2, use_bf16_matmul=True)
    jax.block_until_ready(pred_bf16)
    assert pred_bf16.shape == (B, N, COUT)
    assert bool(jnp.all(jnp.isfinite(pred_bf16))), "bf16 kernel produced non-finite values"
    assert jnp.allclose(pred_bf16, ref, atol=0.15, rtol=0.15), "bf16 kernel mismatch vs reference"

    print("KERNEL_OK")
</pallas_src>

<mosaic_0001>
module attributes {stable_mosaic.version = 11 : i64} {
  func.func @_gnn_pred_kernel(%arg0: i32, %arg1: memref<8x8x16xf32, #tpu.memory_space<vmem>>, %arg2: memref<16x192xf32, #tpu.memory_space<vmem>>, %arg3: memref<1x192xf32, #tpu.memory_space<vmem>>, %arg4: memref<64x64xf32, #tpu.memory_space<vmem>>, %arg5: memref<1x64xf32, #tpu.memory_space<vmem>>, %arg6: memref<1x64xf32, #tpu.memory_space<vmem>>, %arg7: memref<1x64xf32, #tpu.memory_space<vmem>>, %arg8: memref<64x4xf32, #tpu.memory_space<vmem>>, %arg9: memref<1x4xf32, #tpu.memory_space<vmem>>, %arg10: memref<8x8x4xf32, #tpu.memory_space<vmem>>) attributes {dimension_semantics = [#tpu.dimension_semantics<parallel>], iteration_bounds = array<i64: 1>, scalar_prefetch = 0 : i64, scratch_operands = 0 : i64, tpu.core_type = #tpu.core_type<tc>, window_params = [{transform_indices = @transform_0, window_bounds = array<i64: 8, 8, 16>}, {pipeline_mode = #tpu.pipeline_mode<synchronous>, transform_indices = @transform_1, window_bounds = array<i64: 16, 192>}, {pipeline_mode = #tpu.pipeline_mode<synchronous>, transform_indices = @transform_2, window_bounds = array<i64: 1, 192>}, {pipeline_mode = #tpu.pipeline_mode<synchronous>, transform_indices = @transform_3, window_bounds = array<i64: 64, 64>}, {pipeline_mode = #tpu.pipeline_mode<synchronous>, transform_indices = @transform_4, window_bounds = array<i64: 1, 64>}, {pipeline_mode = #tpu.pipeline_mode<synchronous>, transform_indices = @transform_5, window_bounds = array<i64: 1, 64>}, {pipeline_mode = #tpu.pipeline_mode<synchronous>, transform_indices = @transform_6, window_bounds = array<i64: 1, 64>}, {pipeline_mode = #tpu.pipeline_mode<synchronous>, transform_indices = @transform_7, window_bounds = array<i64: 64, 4>}, {pipeline_mode = #tpu.pipeline_mode<synchronous>, transform_indices = @transform_8, window_bounds = array<i64: 1, 4>}, {transform_indices = @transform_9, window_bounds = array<i64: 8, 8, 4>}]} {
    %c0 = arith.constant 0 : index
    %c0_0 = arith.constant 0 : index
    %c0_1 = arith.constant 0 : index
    %0 = vector.load %arg1[%c0, %c0_0, %c0_1] : memref<8x8x16xf32, #tpu.memory_space<vmem>>, vector<8x8x16xf32>
    %1 = vector.shape_cast %0 : vector<8x8x16xf32> to vector<64x16xf32>
    %c0_2 = arith.constant 0 : index
    %c0_3 = arith.constant 0 : index
    %2 = vector.load %arg2[%c0_2, %c0_3] : memref<16x192xf32, #tpu.memory_space<vmem>>, vector<16x192xf32>
    %cst = arith.constant dense<0.000000e+00> : vector<64x192xf32>
    %3 = tpu.matmul %1, %2, %cst {dimension_numbers = #tpu.dot_dimension_numbers<[1], [0], [0], [1], [0, 0, 1, 1], [], []>} : vector<64x16xf32>, vector<16x192xf32>, vector<64x192xf32> -> vector<64x192xf32>
    %c0_4 = arith.constant 0 : index
    %c0_5 = arith.constant 0 : index
    %4 = vector.load %arg3[%c0_4, %c0_5] : memref<1x192xf32, #tpu.memory_space<vmem>>, vector<1x192xf32>
    %5 = vector.broadcast %4 : vector<1x192xf32> to vector<64x192xf32>
    %6 = arith.addf %3, %5 : vector<64x192xf32>
    %7 = vector.extract_strided_slice %6 {offsets = [0, 0], sizes = [64, 64], strides = [1, 1]} : vector<64x192xf32> to vector<64x64xf32>
    %8 = vector.shape_cast %7 : vector<64x64xf32> to vector<8x8x64xf32>
    %9 = vector.extract_strided_slice %6 {offsets = [0, 64], sizes = [64, 64], strides = [1, 1]} : vector<64x192xf32> to vector<64x64xf32>
    %10 = vector.shape_cast %9 : vector<64x64xf32> to vector<8x8x64xf32>
    %11 = vector.extract_strided_slice %6 {offsets = [0, 128], sizes = [64, 64], strides = [1, 1]} : vector<64x192xf32> to vector<64x64xf32>
    %12 = vector.shape_cast %11 : vector<64x64xf32> to vector<8x8x64xf32>
    "tpu.trace_start"() <{level = 10 : i32, message = "bqd,bkd->bqk"}> : () -> ()
    %cst_6 = arith.constant dense<0.000000e+00> : vector<8x8x8xf32>
    %13 = tpu.matmul %8, %10, %cst_6 {dimension_numbers = #tpu.dot_dimension_numbers<[2], [2], [1], [1], [0, 0, 0, 1, 1, 1], [0], [0]>} : vector<8x8x64xf32>, vector<8x8x64xf32>, vector<8x8x8xf32> -> vector<8x8x8xf32>
    "tpu.trace_stop"() : () -> ()
    %cst_7 = arith.constant dense<0xFF800000> : vector<8x8xf32>
    %14 = vector.multi_reduction <maximumf>, %13, %cst_7 [2] : vector<8x8x8xf32> to vector<8x8xf32>
    %15 = vector.shape_cast %14 : vector<8x8xf32> to vector<8x8x1xf32>
    %16 = vector.broadcast %15 : vector<8x8x1xf32> to vector<8x8x8xf32>
    %17 = arith.subf %13, %16 : vector<8x8x8xf32>
    %18 = math.exp %17 : vector<8x8x8xf32>
    %cst_8 = arith.constant dense<0.000000e+00> : vector<8x8xf32>
    %19 = vector.multi_reduction <add>, %18, %cst_8 [2] : vector<8x8x8xf32> to vector<8x8xf32>
    %20 = vector.shape_cast %19 : vector<8x8xf32> to vector<8x8x1xf32>
    %21 = tpu.reciprocal %20 {approx = true} : vector<8x8x1xf32> -> vector<8x8x1xf32>
    %22 = vector.broadcast %21 : vector<8x8x1xf32> to vector<8x8x8xf32>
    %23 = arith.mulf %18, %22 : vector<8x8x8xf32>
    "tpu.trace_start"() <{level = 10 : i32, message = "bqk,bkd->bqd"}> : () -> ()
    %cst_9 = arith.constant dense<0.000000e+00> : vector<8x8x64xf32>
    %24 = tpu.matmul %23, %12, %cst_9 {dimension_numbers = #tpu.dot_dimension_numbers<[2], [1], [1], [2], [0, 0, 0, 1, 1, 2], [0], [0]>} : vector<8x8x8xf32>, vector<8x8x64xf32>, vector<8x8x64xf32> -> vector<8x8x64xf32>
    "tpu.trace_stop"() : () -> ()
    %25 = vector.shape_cast %24 : vector<8x8x64xf32> to vector<64x64xf32>
    %c0_10 = arith.constant 0 : index
    %c0_11 = arith.constant 0 : index
    %26 = vector.load %arg4[%c0_10, %c0_11] : memref<64x64xf32, #tpu.memory_space<vmem>>, vector<64x64xf32>
    %cst_12 = arith.constant dense<0.000000e+00> : vector<64x64xf32>
    %27 = tpu.matmul %25, %26, %cst_12 {dimension_numbers = #tpu.dot_dimension_numbers<[1], [0], [0], [1], [0, 0, 1, 1], [], []>} : vector<64x64xf32>, vector<64x64xf32>, vector<64x64xf32> -> vector<64x64xf32>
    %c0_13 = arith.constant 0 : index
    %c0_14 = arith.constant 0 : index
    %28 = vector.load %arg5[%c0_13, %c0_14] : memref<1x64xf32, #tpu.memory_space<vmem>>, vector<1x64xf32>
    %29 = vector.broadcast %28 : vector<1x64xf32> to vector<64x64xf32>
    %30 = arith.addf %27, %29 : vector<64x64xf32>
    %cst_15 = arith.constant dense<0.000000e+00> : vector<64xf32>
    %31 = vector.multi_reduction <add>, %30, %cst_15 [1] : vector<64x64xf32> to vector<64xf32>
    %32 = vector.shape_cast %31 : vector<64xf32> to vector<64x1xf32>
    %cst_16 = arith.constant 6.400000e+01 : f32
    %33 = vector.broadcast %cst_16 : f32 to vector<64x1xf32>
    %34 = arith.divf %32, %33 : vector<64x1xf32>
    %35 = vector.broadcast %34 : vector<64x1xf32> to vector<64x64xf32>
    %36 = arith.subf %30, %35 : vector<64x64xf32>
    %37 = arith.mulf %36, %36 : vector<64x64xf32>
    %cst_17 = arith.constant dense<0.000000e+00> : vector<64xf32>
    %38 = vector.multi_reduction <add>, %37, %cst_17 [1] : vector<64x64xf32> to vector<64xf32>
    %39 = vector.shape_cast %38 : vector<64xf32> to vector<64x1xf32>
    %cst_18 = arith.constant 6.400000e+01 : f32
    %40 = vector.broadcast %cst_18 : f32 to vector<64x1xf32>
    %41 = arith.divf %39, %40 : vector<64x1xf32>
    %cst_19 = arith.constant 9.99999974E-6 : f32
    %42 = vector.broadcast %cst_19 : f32 to vector<64x1xf32>
    %43 = arith.addf %41, %42 : vector<64x1xf32>
    %44 = math.rsqrt %43 : vector<64x1xf32>
    %45 = vector.broadcast %44 : vector<64x1xf32> to vector<64x64xf32>
    %46 = arith.mulf %36, %45 : vector<64x64xf32>
    %c0_20 = arith.constant 0 : index
    %c0_21 = arith.constant 0 : index
    %47 = vector.load %arg6[%c0_20, %c0_21] : memref<1x64xf32, #tpu.memory_space<vmem>>, vector<1x64xf32>
    %48 = vector.broadcast %47 : vector<1x64xf32> to vector<64x64xf32>
    %49 = arith.mulf %46, %48 : vector<64x64xf32>
    %c0_22 = arith.constant 0 : index
    %c0_23 = arith.constant 0 : index
    %50 = vector.load %arg7[%c0_22, %c0_23] : memref<1x64xf32, #tpu.memory_space<vmem>>, vector<1x64xf32>
    %51 = vector.broadcast %50 : vector<1x64xf32> to vector<64x64xf32>
    %52 = arith.addf %49, %51 : vector<64x64xf32>
    %cst_24 = arith.constant 0.000000e+00 : f32
    %53 = vector.broadcast %cst_24 : f32 to vector<64x64xf32>
    %54 = arith.maximumf %52, %53 : vector<64x64xf32>
    %c0_25 = arith.constant 0 : index
    %c0_26 = arith.constant 0 : index
    %55 = vector.load %arg8[%c0_25, %c0_26] : memref<64x4xf32, #tpu.memory_space<vmem>>, vector<64x4xf32>
    %cst_27 = arith.constant dense<0.000000e+00> : vector<64x4xf32>
    %56 = tpu.matmul %54, %55, %cst_27 {dimension_numbers = #tpu.dot_dimension_numbers<[1], [0], [0], [1], [0, 0, 1, 1], [], []>} : vector<64x64xf32>, vector<64x4xf32>, vector<64x4xf32> -> vector<64x4xf32>
    %c0_28 = arith.constant 0 : index
    %c0_29 = arith.constant 0 : index
    %57 = vector.load %arg9[%c0_28, %c0_29] : memref<1x4xf32, #tpu.memory_space<vmem>>, vector<1x4xf32>
    %58 = vector.broadcast %57 : vector<1x4xf32> to vector<64x4xf32>
    %59 = arith.addf %56, %58 : vector<64x4xf32>
    %60 = vector.shape_cast %59 : vector<64x4xf32> to vector<8x8x4xf32>
    %c0_30 = arith.constant 0 : index
    %c0_31 = arith.constant 0 : index
    %c0_32 = arith.constant 0 : index
    %61 = vector.load %arg10[%c0_30, %c0_31, %c0_32] : memref<8x8x4xf32, #tpu.memory_space<vmem>>, vector<8x8x4xf32>
    tpu.vector_store %arg10[%c0_30, %c0_31, %c0_32], %60 {strides = array<i32>} : memref<8x8x4xf32, #tpu.memory_space<vmem>>, vector<8x8x4xf32>,
    return
  }
  func.func @transform_0(%arg0: i32) -> (i32, i32, i32) {
    %c0_i32 = arith.constant 0 : i32
    %c0_i32_0 = arith.constant 0 : i32
    %c0_i32_1 = arith.constant 0 : i32
    return %arg0, %c0_i32, %c0_i32_0 : i32, i32, i32
  }
  func.func @transform_1(%arg0: i32) -> (i32, i32) {
    %c0_i32 = arith.constant 0 : i32
    %c0_i32_0 = arith.constant 0 : i32
    %c0_i32_1 = arith.constant 0 : i32
    return %c0_i32, %c0_i32_0 : i32, i32
  }
  func.func @transform_2(%arg0: i32) -> (i32, i32) {
    %c0_i32 = arith.constant 0 : i32
    %c0_i32_0 = arith.constant 0 : i32
    %c0_i32_1 = arith.constant 0 : i32
    return %c0_i32, %c0_i32_0 : i32, i32
  }
  func.func @transform_3(%arg0: i32) -> (i32, i32) {
    %c0_i32 = arith.constant 0 : i32
    %c0_i32_0 = arith.constant 0 : i32
    %c0_i32_1 = arith.constant 0 : i32
    return %c0_i32, %c0_i32_0 : i32, i32
  }
  func.func @transform_4(%arg0: i32) -> (i32, i32) {
    %c0_i32 = arith.constant 0 : i32
    %c0_i32_0 = arith.constant 0 : i32
    %c0_i32_1 = arith.constant 0 : i32
    return %c0_i32, %c0_i32_0 : i32, i32
  }
  func.func @transform_5(%arg0: i32) -> (i32, i32) {
    %c0_i32 = arith.constant 0 : i32
    %c0_i32_0 = arith.constant 0 : i32
    %c0_i32_1 = arith.constant 0 : i32
    return %c0_i32, %c0_i32_0 : i32, i32
  }
  func.func @transform_6(%arg0: i32) -> (i32, i32) {
    %c0_i32 = arith.constant 0 : i32
    %c0_i32_0 = arith.constant 0 : i32
    %c0_i32_1 = arith.constant 0 : i32
    return %c0_i32, %c0_i32_0 : i32, i32
  }
  func.func @transform_7(%arg0: i32) -> (i32, i32) {
    %c0_i32 = arith.constant 0 : i32
    %c0_i32_0 = arith.constant 0 : i32
    %c0_i32_1 = arith.constant 0 : i32
    return %c0_i32, %c0_i32_0 : i32, i32
  }
  func.func @transform_8(%arg0: i32) -> (i32, i32) {
    %c0_i32 = arith.constant 0 : i32
    %c0_i32_0 = arith.constant 0 : i32
    %c0_i32_1 = arith.constant 0 : i32
    return %c0_i32, %c0_i32_0 : i32, i32
  }
  func.func @transform_9(%arg0: i32) -> (i32, i32, i32) {
    %c0_i32 = arith.constant 0 : i32
    %c0_i32_0 = arith.constant 0 : i32
    %c0_i32_1 = arith.constant 0 : i32
    return %arg0, %c0_i32, %c0_i32_0 : i32, i32, i32
  }
}

</mosaic_0001>

<llo_original>
// kernel: tpu_custom_call.1
$region0: #{tpu_custom_call.1}
  #allocation0 [shape = 'u32[]', space=smem, size = 0x4, offset = 0x4, fixed_abs, tag = 'smem constant byte address 0x4 - core index']
  #allocation1 [shape = 'u32[144,128]{1,0:T(1,128)}', space=vmem, size = 0x12000, scoped, tag = 'internal scratch']
  %s0 = inlined_call_operand.vmem [shape: f32[8,8,16], index: 0, kind: input, shape index: {}]
  %s1 = inlined_call_operand.hbm [shape: f32[16,192], index: 1, kind: input, shape index: {}]
  %s2 = inlined_call_operand.vmem [shape: f32[1,192], index: 2, kind: input, shape index: {}]
  %s3 = inlined_call_operand.hbm [shape: f32[64,64], index: 3, kind: input, shape index: {}]
  %s4 = inlined_call_operand.vmem [shape: f32[1,64], index: 4, kind: input, shape index: {}]
  %s5 = inlined_call_operand.vmem [shape: f32[1,64], index: 5, kind: input, shape index: {}]
  %s6 = inlined_call_operand.vmem [shape: f32[1,64], index: 6, kind: input, shape index: {}]
  %s7 = inlined_call_operand.vmem [shape: f32[64,4], index: 7, kind: input, shape index: {}]
  %s8 = inlined_call_operand.vmem [shape: f32[1,4], index: 8, kind: input, shape index: {}]
  %s9 = inlined_call_operand.vmem [shape: f32[8,8,4], index: 9, kind: output, shape index: {}]
  %s10 = sld [smem:[#allocation0]]
  $region54: #{tpu_custom_call.1} parent=0
    _
  %s12 = ssub.s32 1, %s10
  %s13 = scalar_select 0, %s12, %s10
  $region1: #{tpu_custom_call.1} parent=0
    #allocation2 [shape = 'u8[16384]{0}', space=vmem, size = 0x4000, scoped, tag = 'input window, operand 1, single buffered']
    #allocation3 [shape = 's32[1]{0}', space=sflag, size = 0x4, scoped, tag = 'scoped memory for tpu_custom_call.1']
    #allocation4 [shape = 'u8[32768]{0}', space=vmem, size = 0x8000, scoped, tag = 'input window, operand 3, single buffered']
    #allocation5 [shape = 's32[1]{0}', space=sflag, size = 0x4, scoped, tag = 'scoped memory for tpu_custom_call.1']
    %14 = vsyncpa [#allocation3], 0
    %15 = vsyncpa [#allocation5], 0
    // Predicated region
    $region2: #{tpu_custom_call.1} parent=1 // pred_check
      _
    $region3: #{tpu_custom_call.1} parent=1 // pred_check_branch
      %17 = sbr.rel (0) target = $region5
    $region4: #{tpu_custom_call.1} parent=1 // pred_region
      _
    $region5: #{tpu_custom_call.1} parent=1 // pred_fallthru
      _
    // Predicated region
    $region6: #{tpu_custom_call.1} parent=1 // pred_check
      _
    $region7: #{tpu_custom_call.1} parent=1 // pred_check_branch
      %19 = sbr.rel (0) target = $region9
    $region8: #{tpu_custom_call.1} parent=1 // pred_region
      %s21 = ssub.s32 512, 512
      %22 = vsyncadd [#allocation3], %s21
      %s23 = sshll.u32 [#allocation2], 4
      %s24 = int_to_ptr.vmem [resolvable:$true] %s23
      %29 = dma.hbm_to_vmem [thread:$0]  %s1, 512, %s24, [#allocation3], 256, 256, 16
    $region9: #{tpu_custom_call.1} parent=1 // pred_fallthru
      _
    // Predicated region
    $region10: #{tpu_custom_call.1} parent=1 // pred_check
      _
    $region11: #{tpu_custom_call.1} parent=1 // pred_check_branch
      %31 = sbr.rel (0) target = $region13
    $region12: #{tpu_custom_call.1} parent=1 // pred_region
      _
    $region13: #{tpu_custom_call.1} parent=1 // pred_fallthru
      _
    // Predicated region
    $region14: #{tpu_custom_call.1} parent=1 // pred_check
      _
    $region15: #{tpu_custom_call.1} parent=1 // pred_check_branch
      %33 = sbr.rel (0) target = $region17
    $region16: #{tpu_custom_call.1} parent=1 // pred_region
      %s35 = ssub.s32 1024, 1024
      %36 = vsyncadd [#allocation5], %s35
      %s37 = sshll.u32 [#allocation4], 4
      %s38 = int_to_ptr.vmem [resolvable:$true] %s37
      %43 = dma.hbm_to_vmem [thread:$0]  %s3, 1024, %s38, [#allocation5], 128, 128, 8
    $region17: #{tpu_custom_call.1} parent=1 // pred_fallthru
      _
    // Predicated region
    $region18: #{tpu_custom_call.1} parent=1 // pred_check
      _
    $region19: #{tpu_custom_call.1} parent=1 // pred_check_branch
      %45 = sbr.rel (0) target = $region21
    $region20: #{tpu_custom_call.1} parent=1 // pred_region
      _
    $region21: #{tpu_custom_call.1} parent=1 // pred_fallthru
      _
    // Predicated region
    $region22: #{tpu_custom_call.1} parent=1 // pred_check
      _
    $region23: #{tpu_custom_call.1} parent=1 // pred_check_branch
      %47 = sbr.rel (0) target = $region25
    $region24: #{tpu_custom_call.1} parent=1 // pred_region
      _
    $region25: #{tpu_custom_call.1} parent=1 // pred_fallthru
      _
    // Predicated region
    $region26: #{tpu_custom_call.1} parent=1 // pred_check
      _
    $region27: #{tpu_custom_call.1} parent=1 // pred_check_branch
      %49 = sbr.rel (0) target = $region29
    $region28: #{tpu_custom_call.1} parent=1 // pred_region
      _
    $region29: #{tpu_custom_call.1} parent=1 // pred_fallthru
      _
    // Predicated region
    $region30: #{tpu_custom_call.1} parent=1 // pred_check
      _
    $region31: #{tpu_custom_call.1} parent=1 // pred_check_branch
      %51 = sbr.rel (0) target = $region33
    $region32: #{tpu_custom_call.1} parent=1 // pred_region
      _
    $region33: #{tpu_custom_call.1} parent=1 // pred_fallthru
      _
    // Predicated region
    $region34: #{tpu_custom_call.1} parent=1 // pred_check
      _
    $region35: #{tpu_custom_call.1} parent=1 // pred_check_branch
      %53 = sbr.rel (0) target = $region37
    $region36: #{tpu_custom_call.1} parent=1 // pred_region
      _
    $region37: #{tpu_custom_call.1} parent=1 // pred_fallthru
      _
    // Predicated region
    $region38: #{tpu_custom_call.1} parent=1 // pred_check
      _
    $region39: #{tpu_custom_call.1} parent=1 // pred_check_branch
      %55 = sbr.rel (0) target = $region41
    $region40: #{tpu_custom_call.1} parent=1 // pred_region
      %56 = dma.done [#allocation3], 512
    $region41: #{tpu_custom_call.1} parent=1 // pred_fallthru
      _
    // Predicated region
    $region42: #{tpu_custom_call.1} parent=1 // pred_check
      _
    $region43: #{tpu_custom_call.1} parent=1 // pred_check_branch
      %58 = sbr.rel (0) target = $region45
    $region44: #{tpu_custom_call.1} parent=1 // pred_region
      %59 = dma.done [#allocation5], 1024
    $region45: #{tpu_custom_call.1} parent=1 // pred_fallthru
      _
    %v60 = vld [vmem:[%s0] sm:$0xff]
    %v61 = vld [vmem:[%s0 + $0x8] sm:$0xff]
    %v62 = vld [vmem:[%s0 + $0x10] sm:$0xff]
    %v63 = vld [vmem:[%s0 + $0x18] sm:$0xff]
    %v64 = vld [vmem:[%s0 + $0x20] sm:$0xff]
    %v65 = vld [vmem:[%s0 + $0x28] sm:$0xff]
    %v66 = vld [vmem:[%s0 + $0x30] sm:$0xff]
    %v67 = vld [vmem:[%s0 + $0x38] sm:$0xff]
    %v68 = vld [vmem:[#allocation2] sm:$0xff]
    %v69 = vld [vmem:[#allocation2 + $0x8] sm:$0xff]
    %v70 = vld [vmem:[#allocation2 + $0x10] sm:$0xff]
    %v71 = vld [vmem:[#allocation2 + $0x18] sm:$0xff]
    %v72 = vld [vmem:[%s2] sm:$0x3]
    %v74 = vlaneseq
    %v75 = vshrl.u32 %v74, 7
    %v76 = vsub.s32 0, %v75
    %v77 = vrot.slane %v72, %v76
    %v78 = vlaneseq
    %v79 = vshrl.u32 %v78, 7
    %v80 = vsub.s32 1, %v79
    %v81 = vrot.slane %v72, %v80
    %vm84 = vcmask 130048
    %v86 = vsel %vm84, %v60, 0
    %v89 = vsel %vm84, %v61, 0
    %v92 = vsel %vm84, %v62, 0
    %v95 = vsel %vm84, %v63, 0
    %v98 = vsel %vm84, %v64, 0
    %v101 = vsel %vm84, %v65, 0
    %v104 = vsel %vm84, %v66, 0
    %v107 = vsel %vm84, %v67, 0
    %109 = vmatprep.subr.mxu0 0.0
    %110 = vmatpush1.msra.mxu0 0.0
    %111 = vmatprep.subr.mxu0 0.0
    %112 = vmatpush1.msra.mxu0 0.0
    %113 = vmatprep.subr.mxu0 0.0
    %114 = vmatpush1.msra.mxu0 0.0
    %115 = vmatprep.subr.mxu0 0.0
    %116 = vmatpush1.msra.mxu0 0.0
    %117 = vmatprep.subr.mxu0 0.0
    %118 = vmatpush1.msra.mxu0 0.0
    %119 = vmatprep.subr.mxu0 0.0
    %120 = vmatpush1.msra.mxu0 0.0
    %121 = vmatprep.subr.mxu0 0.0
    %122 = vmatpush1.msra.mxu0 0.0
    %123 = vmatprep.subr.mxu0 0.0
    %124 = vmatpush1.msra.mxu0 0.0
    %125 = vmatprep.subr.mxu0 0.0
    %126 = vmatpush1.msra.mxu0 0.0
    %127 = vmatprep.subr.mxu0 0.0
    %128 = vmatpush1.msra.mxu0 0.0
    %129 = vmatprep.subr.mxu0 0.0
    %130 = vmatpush1.msra.mxu0 0.0
    %131 = vmatprep.subr.mxu0 0.0
    %132 = vmatpush1.msra.mxu0 0.0
    %133 = vmatprep.subr.mxu0 0.0
    %134 = vmatpush1.msra.mxu0 0.0
    %135 = vmatprep.subr.mxu0 0.0
    %136 = vmatpush1.msra.mxu0 0.0
    %137 = vmatprep.subr.mxu0 %v71
    %138 = vmatpush1.msra.mxu0 %v70
    %139 = vmatprep.subr.mxu0 %v69
    %140 = vmatpush1.msra.mxu0 %v68
    %141 = vmatprep.subr.mxu0 0.0
    %142 = vmatpush2.msra.mxu0 0.0
    %143 = vmatprep.subr.mxu0 0.0
    %144 = vmatpush2.msra.mxu0 0.0
    %145 = vmatprep.subr.mxu0 0.0
    %146 = vmatpush2.msra.mxu0 0.0
    %147 = vmatprep.subr.mxu0 0.0
    %148 = vmatpush2.msra.mxu0 0.0
    %149 = vmatprep.subr.mxu0 0.0
    %150 = vmatpush2.msra.mxu0 0.0
    %151 = vmatprep.subr.mxu0 0.0
    %152 = vmatpush2.msra.mxu0 0.0
    %153 = vmatprep.subr.mxu0 0.0
    %154 = vmatpush2.msra.mxu0 0.0
    %155 = vmatprep.subr.mxu0 0.0
    %156 = vmatpush2.msra.mxu0 0.0
    %157 = vmatprep.subr.mxu0 0.0
    %158 = vmatpush2.msra.mxu0 0.0
    %159 = vmatprep.subr.mxu0 0.0
    %160 = vmatpush2.msra.mxu0 0.0
    %161 = vmatprep.subr.mxu0 0.0
    %162 = vmatpush2.msra.mxu0 0.0
    %163 = vmatprep.subr.mxu0 0.0
    %164 = vmatpush2.msra.mxu0 0.0
    %165 = vmatprep.subr.mxu0 0.0
    %166 = vmatpush2.msra.mxu0 0.0
    %167 = vmatprep.subr.mxu0 0.0
    %168 = vmatpush2.msra.mxu0 0.0
    %169 = vmatprep.subr.mxu0 0.0
    %170 = vmatpush2.msra.mxu0 0.0
    %171 = vmatprep.subr.mxu0 0.0
    %172 = vmatpush2.msra.mxu0 0.0
    %173 = vmatprep.mubr.f32.mxu0 0.0
    %174 = vmatmul.mubr.f32.gmra.mxu0 %v86
    %v175 = vpop.f32.mrf.mxu0
    %v176 = vadd.f32 %v77, %v175
    %v177 = vpop.f32.mrf.mxu0
    %v178 = vadd.f32 %v81, %v177
    %179 = vmatprep.mubr.f32.mxu0 0.0
    %180 = vmatmul.mubr.f32.gmra.mxu0 %v89
    %v181 = vpop.f32.mrf.mxu0
    %v182 = vadd.f32 %v77, %v181
    %v183 = vpop.f32.mrf.mxu0
    %v184 = vadd.f32 %v81, %v183
    %185 = vmatprep.mubr.f32.mxu0 0.0
    %186 = vmatmul.mubr.f32.gmra.mxu0 %v92
    %v187 = vpop.f32.mrf.mxu0
    %v188 = vadd.f32 %v77, %v187
    %v189 = vpop.f32.mrf.mxu0
    %v190 = vadd.f32 %v81, %v189
    %191 = vmatprep.mubr.f32.mxu0 0.0
    %192 = vmatmul.mubr.f32.gmra.mxu0 %v95
    %v193 = vpop.f32.mrf.mxu0
    %v194 = vadd.f32 %v77, %v193
    %v195 = vpop.f32.mrf.mxu0
    %v196 = vadd.f32 %v81, %v195
    %197 = vmatprep.mubr.f32.mxu0 0.0
    %198 = vmatmul.mubr.f32.gmra.mxu0 %v98
    %v199 = vpop.f32.mrf.mxu0
    %v200 = vadd.f32 %v77, %v199
    %v201 = vpop.f32.mrf.mxu0
    %v202 = vadd.f32 %v81, %v201
    %203 = vmatprep.mubr.f32.mxu0 0.0
    %204 = vmatmul.mubr.f32.gmra.mxu0 %v101
    %v205 = vpop.f32.mrf.mxu0
    %v206 = vadd.f32 %v77, %v205
    %v207 = vpop.f32.mrf.mxu0
    %v208 = vadd.f32 %v81, %v207
    %209 = vmatprep.mubr.f32.mxu0 0.0
    %210 = vmatmul.mubr.f32.gmra.mxu0 %v104
    %v211 = vpop.f32.mrf.mxu0
    %v212 = vadd.f32 %v77, %v211
    %v213 = vpop.f32.mrf.mxu0
    %v214 = vadd.f32 %v81, %v213
    %215 = vmatprep.mubr.f32.mxu0 0.0
    %216 = vmatmul.mubr.f32.gmra.mxu0 %v107
    %v217 = vpop.f32.mrf.mxu0
    %v218 = vadd.f32 %v77, %v217
    %v219 = vpop.f32.mrf.mxu0
    %v220 = vadd.f32 %v81, %v219
    %221 = vdwg.mxu0
    %223 = vrot.lane.b32.xlu0 %v176, 64
    %v224 = vpop.permute.xlu0 %223
    %vm225 = vcmask 523264
    %v226 = vsel %vm225, %v176, 0
    %v228 = vsel %vm225, %v224, 0
    %230 = vmatprep.subr.mxu0 0.0
    %231 = vmatpush1.xpose.msra.mxu0 0.0
    %232 = vmatprep.subr.mxu0 0.0
    %233 = vmatpush1.xpose.msra.mxu0 0.0
    %234 = vmatprep.subr.mxu0 0.0
    %235 = vmatpush1.xpose.msra.mxu0 0.0
    %236 = vmatprep.subr.mxu0 0.0
    %237 = vmatpush1.xpose.msra.mxu0 0.0
    %238 = vmatprep.subr.mxu0 0.0
    %239 = vmatpush1.xpose.msra.mxu0 0.0
    %240 = vmatprep.subr.mxu0 0.0
    %241 = vmatpush1.xpose.msra.mxu0 0.0
    %242 = vmatprep.subr.mxu0 0.0
    %243 = vmatpush1.xpose.msra.mxu0 0.0
    %244 = vmatprep.subr.mxu0 0.0
    %245 = vmatpush1.xpose.msra.mxu0 0.0
    %246 = vmatprep.subr.mxu0 0.0
    %247 = vmatpush1.xpose.msra.mxu0 0.0
    %248 = vmatprep.subr.mxu0 0.0
    %249 = vmatpush1.xpose.msra.mxu0 0.0
    %250 = vmatprep.subr.mxu0 0.0
    %251 = vmatpush1.xpose.msra.mxu0 0.0
    %252 = vmatprep.subr.mxu0 0.0
    %253 = vmatpush1.xpose.msra.mxu0 0.0
    %254 = vmatprep.subr.mxu0 0.0
    %255 = vmatpush1.xpose.msra.mxu0 0.0
    %256 = vmatprep.subr.mxu0 0.0
    %257 = vmatpush1.xpose.msra.mxu0 0.0
    %258 = vmatprep.subr.mxu0 0.0
    %259 = vmatpush1.xpose.msra.mxu0 0.0
    %260 = vmatprep.subr.mxu0 0.0
    %261 = vmatpush1.xpose.msra.mxu0 %v228
    %262 = vmatprep.subr.mxu0 0.0
    %263 = vmatpush2.xpose.msra.mxu0 0.0
    %264 = vmatprep.subr.mxu0 0.0
    %265 = vmatpush2.xpose.msra.mxu0 0.0
    %266 = vmatprep.subr.mxu0 0.0
    %267 = vmatpush2.xpose.msra.mxu0 0.0
    %268 = vmatprep.subr.mxu0 0.0
    %269 = vmatpush2.xpose.msra.mxu0 0.0
    %270 = vmatprep.subr.mxu0 0.0
    %271 = vmatpush2.xpose.msra.mxu0 0.0
    %272 = vmatprep.subr.mxu0 0.0
    %273 = vmatpush2.xpose.msra.mxu0 0.0
    %274 = vmatprep.subr.mxu0 0.0
    %275 = vmatpush2.xpose.msra.mxu0 0.0
    %276 = vmatprep.subr.mxu0 0.0
    %277 = vmatpush2.xpose.msra.mxu0 0.0
    %278 = vmatprep.subr.mxu0 0.0
    %279 = vmatpush2.xpose.msra.mxu0 0.0
    %280 = vmatprep.subr.mxu0 0.0
    %281 = vmatpush2.xpose.msra.mxu0 0.0
    %282 = vmatprep.subr.mxu0 0.0
    %283 = vmatpush2.xpose.msra.mxu0 0.0
    %284 = vmatprep.subr.mxu0 0.0
    %285 = vmatpush2.xpose.msra.mxu0 0.0
    %286 = vmatprep.subr.mxu0 0.0
    %287 = vmatpush2.xpose.msra.mxu0 0.0
    %288 = vmatprep.subr.mxu0 0.0
    %289 = vmatpush2.xpose.msra.mxu0 0.0
    %290 = vmatprep.subr.mxu0 0.0
    %291 = vmatpush2.xpose.msra.mxu0 0.0
    %292 = vmatprep.subr.mxu0 0.0
    %293 = vmatpush2.xpose.msra.mxu0 0.0
    %294 = vmatprep.mubr.f32.mxu0 0.0
    %295 = vmatmul.mubr.f32.gmra.mxu0 %v226
    %v296 = vpop.f32.mrf.mxu0
    %v297 = vadd.f32 0.0, %v296
    %v298 = vpop.f32.mrf.mxu0
    %299 = vdwg.mxu0
    %301 = vrot.lane.b32.xlu0 %v182, 64
    %v302 = vpop.permute.xlu0 %301
    %v303 = vsel %vm225, %v182, 0
    %v305 = vsel %vm225, %v302, 0
    %307 = vmatprep.subr.mxu0 0.0
    %308 = vmatpush1.xpose.msra.mxu0 0.0
    %309 = vmatprep.subr.mxu0 0.0
    %310 = vmatpush1.xpose.msra.mxu0 0.0
    %311 = vmatprep.subr.mxu0 0.0
    %312 = vmatpush1.xpose.msra.mxu0 0.0
    %313 = vmatprep.subr.mxu0 0.0
    %314 = vmatpush1.xpose.msra.mxu0 0.0
    %315 = vmatprep.subr.mxu0 0.0
    %316 = vmatpush1.xpose.msra.mxu0 0.0
    %317 = vmatprep.subr.mxu0 0.0
    %318 = vmatpush1.xpose.msra.mxu0 0.0
    %319 = vmatprep.subr.mxu0 0.0
    %320 = vmatpush1.xpose.msra.mxu0 0.0
    %321 = vmatprep.subr.mxu0 0.0
    %322 = vmatpush1.xpose.msra.mxu0 0.0
    %323 = vmatprep.subr.mxu0 0.0
    %324 = vmatpush1.xpose.msra.mxu0 0.0
    %325 = vmatprep.subr.mxu0 0.0
    %326 = vmatpush1.xpose.msra.mxu0 0.0
    %327 = vmatprep.subr.mxu0 0.0
    %328 = vmatpush1.xpose.msra.mxu0 0.0
    %329 = vmatprep.subr.mxu0 0.0
    %330 = vmatpush1.xpose.msra.mxu0 0.0
    %331 = vmatprep.subr.mxu0 0.0
    %332 = vmatpush1.xpose.msra.mxu0 0.0
    %333 = vmatprep.subr.mxu0 0.0
    %334 = vmatpush1.xpose.msra.mxu0 0.0
    %335 = vmatprep.subr.mxu0 0.0
    %336 = vmatpush1.xpose.msra.mxu0 0.0
    %337 = vmatprep.subr.mxu0 0.0
    %338 = vmatpush1.xpose.msra.mxu0 %v305
    %339 = vmatprep.subr.mxu0 0.0
    %340 = vmatpush2.xpose.msra.mxu0 0.0
    %341 = vmatprep.subr.mxu0 0.0
    %342 = vmatpush2.xpose.msra.mxu0 0.0
    %343 = vmatprep.subr.mxu0 0.0
    %344 = vmatpush2.xpose.msra.mxu0 0.0
    %345 = vmatprep.subr.mxu0 0.0
    %346 = vmatpush2.xpose.msra.mxu0 0.0
    %347 = vmatprep.subr.mxu0 0.0
    %348 = vmatpush2.xpose.msra.mxu0 0.0
    %349 = vmatprep.subr.mxu0 0.0
    %350 = vmatpush2.xpose.msra.mxu0 0.0
    %351 = vmatprep.subr.mxu0 0.0
    %352 = vmatpush2.xpose.msra.mxu0 0.0
    %353 = vmatprep.subr.mxu0 0.0
    %354 = vmatpush2.xpose.msra.mxu0 0.0
    %355 = vmatprep.subr.mxu0 0.0
    %356 = vmatpush2.xpose.msra.mxu0 0.0
    %357 = vmatprep.subr.mxu0 0.0
    %358 = vmatpush2.xpose.msra.mxu0 0.0
    %359 = vmatprep.subr.mxu0 0.0
    %360 = vmatpush2.xpose.msra.mxu0 0.0
    %361 = vmatprep.subr.mxu0 0.0
    %362 = vmatpush2.xpose.msra.mxu0 0.0
    %363 = vmatprep.subr.mxu0 0.0
    %364 = vmatpush2.xpose.msra.mxu0 0.0
    %365 = vmatprep.subr.mxu0 0.0
    %366 = vmatpush2.xpose.msra.mxu0 0.0
    %367 = vmatprep.subr.mxu0 0.0
    %368 = vmatpush2.xpose.msra.mxu0 0.0
    %369 = vmatprep.subr.mxu0 0.0
    %370 = vmatpush2.xpose.msra.mxu0 0.0
    %371 = vmatprep.mubr.f32.mxu0 0.0
    %372 = vmatmul.mubr.f32.gmra.mxu0 %v303
    %v373 = vpop.f32.mrf.mxu0
    %v374 = vadd.f32 0.0, %v373
    %v375 = vpop.f32.mrf.mxu0
    %376 = vdwg.mxu0
    %378 = vrot.lane.b32.xlu0 %v188, 64
    %v379 = vpop.permute.xlu0 %378
    %v380 = vsel %vm225, %v188, 0
    %v382 = vsel %vm225, %v379, 0
    %384 = vmatprep.subr.mxu0 0.0
    %385 = vmatpush1.xpose.msra.mxu0 0.0
    %386 = vmatprep.subr.mxu0 0.0
    %387 = vmatpush1.xpose.msra.mxu0 0.0
    %388 = vmatprep.subr.mxu0 0.0
    %389 = vmatpush1.xpose.msra.mxu0 0.0
    %390 = vmatprep.subr.mxu0 0.0
    %391 = vmatpush1.xpose.msra.mxu0 0.0
    %392 = vmatprep.subr.mxu0 0.0
    %393 = vmatpush1.xpose.msra.mxu0 0.0
    %394 = vmatprep.subr.mxu0 0.0
    %395 = vmatpush1.xpose.msra.mxu0 0.0
    %396 = vmatprep.subr.mxu0 0.0
    %397 = vmatpush1.xpose.msra.mxu0 0.0
    %398 = vmatprep.subr.mxu0 0.0
    %399 = vmatpush1.xpose.msra.mxu0 0.0
    %400 = vmatprep.subr.mxu0 0.0
    %401 = vmatpush1.xpose.msra.mxu0 0.0
    %402 = vmatprep.subr.mxu0 0.0
    %403 = vmatpush1.xpose.msra.mxu0 0.0
    %404 = vmatprep.subr.mxu0 0.0
    %405 = vmatpush1.xpose.msra.mxu0 0.0
    %406 = vmatprep.subr.mxu0 0.0
    %407 = vmatpush1.xpose.msra.mxu0 0.0
    %408 = vmatprep.subr.mxu0 0.0
    %409 = vmatpush1.xpose.msra.mxu0 0.0
    %410 = vmatprep.subr.mxu0 0.0
    %411 = vmatpush1.xpose.msra.mxu0 0.0
    %412 = vmatprep.subr.mxu0 0.0
    %413 = vmatpush1.xpose.msra.mxu0 0.0
    %414 = vmatprep.subr.mxu0 0.0
    %415 = vmatpush1.xpose.msra.mxu0 %v382
    %416 = vmatprep.subr.mxu0 0.0
    %417 = vmatpush2.xpose.msra.mxu0 0.0
    %418 = vmatprep.subr.mxu0 0.0
    %419 = vmatpush2.xpose.msra.mxu0 0.0
    %420 = vmatprep.subr.mxu0 0.0
    %421 = vmatpush2.xpose.msra.mxu0 0.0
    %422 = vmatprep.subr.mxu0 0.0
    %423 = vmatpush2.xpose.msra.mxu0 0.0
    %424 = vmatprep.subr.mxu0 0.0
    %425 = vmatpush2.xpose.msra.mxu0 0.0
    %426 = vmatprep.subr.mxu0 0.0
    %427 = vmatpush2.xpose.msra.mxu0 0.0
    %428 = vmatprep.subr.mxu0 0.0
    %429 = vmatpush2.xpose.msra.mxu0 0.0
    %430 = vmatprep.subr.mxu0 0.0
    %431 = vmatpush2.xpose.msra.mxu0 0.0
    %432 = vmatprep.subr.mxu0 0.0
    %433 = vmatpush2.xpose.msra.mxu0 0.0
    %434 = vmatprep.subr.mxu0 0.0
    %435 = vmatpush2.xpose.msra.mxu0 0.0
    %436 = vmatprep.subr.mxu0 0.0
    %437 = vmatpush2.xpose.msra.mxu0 0.0
    %438 = vmatprep.subr.mxu0 0.0
    %439 = vmatpush2.xpose.msra.mxu0 0.0
    %440 = vmatprep.subr.mxu0 0.0
    %441 = vmatpush2.xpose.msra.mxu0 0.0
    %442 = vmatprep.subr.mxu0 0.0
    %443 = vmatpush2.xpose.msra.mxu0 0.0
    %444 = vmatprep.subr.mxu0 0.0
    %445 = vmatpush2.xpose.msra.mxu0 0.0
    %446 = vmatprep.subr.mxu0 0.0
    %447 = vmatpush2.xpose.msra.mxu0 0.0
    %448 = vmatprep.mubr.f32.mxu0 0.0
    %449 = vmatmul.mubr.f32.gmra.mxu0 %v380
    %v450 = vpop.f32.mrf.mxu0
    %v451 = vadd.f32 0.0, %v450
    %v452 = vpop.f32.mrf.mxu0
    %453 = vdwg.mxu0
    %455 = vrot.lane.b32.xlu0 %v194, 64
    %v456 = vpop.permute.xlu0 %455
    %v457 = vsel %vm225, %v194, 0
    %v459 = vsel %vm225, %v456, 0
    %461 = vmatprep.subr.mxu0 0.0
    %462 = vmatpush1.xpose.msra.mxu0 0.0
    %463 = vmatprep.subr.mxu0 0.0
    %464 = vmatpush1.xpose.msra.mxu0 0.0
    %465 = vmatprep.subr.mxu0 0.0
    %466 = vmatpush1.xpose.msra.mxu0 0.0
    %467 = vmatprep.subr.mxu0 0.0
    %468 = vmatpush1.xpose.msra.mxu0 0.0
    %469 = vmatprep.subr.mxu0 0.0
    %470 = vmatpush1.xpose.msra.mxu0 0.0
    %471 = vmatprep.subr.mxu0 0.0
    %472 = vmatpush1.xpose.msra.mxu0 0.0
    %473 = vmatprep.subr.mxu0 0.0
    %474 = vmatpush1.xpose.msra.mxu0 0.0
    %475 = vmatprep.subr.mxu0 0.0
    %476 = vmatpush1.xpose.msra.mxu0 0.0
    %477 = vmatprep.subr.mxu0 0.0
    %478 = vmatpush1.xpose.msra.mxu0 0.0
    %479 = vmatprep.subr.mxu0 0.0
    %480 = vmatpush1.xpose.msra.mxu0 0.0
    %481 = vmatprep.subr.mxu0 0.0
    %482 = vmatpush1.xpose.msra.mxu0 0.0
    %483 = vmatprep.subr.mxu0 0.0
    %484 = vmatpush1.xpose.msra.mxu0 0.0
    %485 = vmatprep.subr.mxu0 0.0
    %486 = vmatpush1.xpose.msra.mxu0 0.0
    %487 = vmatprep.subr.mxu0 0.0
    %488 = vmatpush1.xpose.msra.mxu0 0.0
    %489 = vmatprep.subr.mxu0 0.0
    %490 = vmatpush1.xpose.msra.mxu0 0.0
    %491 = vmatprep.subr.mxu0 0.0
    %492 = vmatpush1.xpose.msra.mxu0 %v459
    %493 = vmatprep.subr.mxu0 0.0
    %494 = vmatpush2.xpose.msra.mxu0 0.0
    %495 = vmatprep.subr.mxu0 0.0
    %496 = vmatpush2.xpose.msra.mxu0 0.0
    %497 = vmatprep.subr.mxu0 0.0
    %498 = vmatpush2.xpose.msra.mxu0 0.0
    %499 = vmatprep.subr.mxu0 0.0
    %500 = vmatpush2.xpose.msra.mxu0 0.0
    %501 = vmatprep.subr.mxu0 0.0
    %502 = vmatpush2.xpose.msra.mxu0 0.0
    %503 = vmatprep.subr.mxu0 0.0
    %504 = vmatpush2.xpose.msra.mxu0 0.0
    %505 = vmatprep.subr.mxu0 0.0
    %506 = vmatpush2.xpose.msra.mxu0 0.0
    %507 = vmatprep.subr.mxu0 0.0
    %508 = vmatpush2.xpose.msra.mxu0 0.0
    %509 = vmatprep.subr.mxu0 0.0
    %510 = vmatpush2.xpose.msra.mxu0 0.0
    %511 = vmatprep.subr.mxu0 0.0
    %512 = vmatpush2.xpose.msra.mxu0 0.0
    %513 = vmatprep.subr.mxu0 0.0
    %514 = vmatpush2.xpose.msra.mxu0 0.0
    %515 = vmatprep.subr.mxu0 0.0
    %516 = vmatpush2.xpose.msra.mxu0 0.0
    %517 = vmatprep.subr.mxu0 0.0
    %518 = vmatpush2.xpose.msra.mxu0 0.0
    %519 = vmatprep.subr.mxu0 0.0
    %520 = vmatpush2.xpose.msra.mxu0 0.0
    %521 = vmatprep.subr.mxu0 0.0
    %522 = vmatpush2.xpose.msra.mxu0 0.0
    %523 = vmatprep.subr.mxu0 0.0
    %524 = vmatpush2.xpose.msra.mxu0 0.0
    %525 = vmatprep.mubr.f32.mxu0 0.0
    %526 = vmatmul.mubr.f32.gmra.mxu0 %v457
    %v527 = vpop.f32.mrf.mxu0
    %v528 = vadd.f32 0.0, %v527
    %v529 = vpop.f32.mrf.mxu0
    %530 = vdwg.mxu0
    %532 = vrot.lane.b32.xlu0 %v200, 64
    %v533 = vpop.permute.xlu0 %532
    %v534 = vsel %vm225, %v200, 0
    %v536 = vsel %vm225, %v533, 0
    %538 = vmatprep.subr.mxu0 0.0
    %539 = vmatpush1.xpose.msra.mxu0 0.0
    %540 = vmatprep.subr.mxu0 0.0
    %541 = vmatpush1.xpose.msra.mxu0 0.0
    %542 = vmatprep.subr.mxu0 0.0
    %543 = vmatpush1.xpose.msra.mxu0 0.0
    %544 = vmatprep.subr.mxu0 0.0
    %545 = vmatpush1.xpose.msra.mxu0 0.0
    %546 = vmatprep.subr.mxu0 0.0
    %547 = vmatpush1.xpose.msra.mxu0 0.0
    %548 = vmatprep.subr.mxu0 0.0
    %549 = vmatpush1.xpose.msra.mxu0 0.0
    %550 = vmatprep.subr.mxu0 0.0
    %551 = vmatpush1.xpose.msra.mxu0 0.0
    %552 = vmatprep.subr.mxu0 0.0
    %553 = vmatpush1.xpose.msra.mxu0 0.0
    %554 = vmatprep.subr.mxu0 0.0
    %555 = vmatpush1.xpose.msra.mxu0 0.0
    %556 = vmatprep.subr.mxu0 0.0
    %557 = vmatpush1.xpose.msra.mxu0 0.0
    %558 = vmatprep.subr.mxu0 0.0
    %559 = vmatpush1.xpose.msra.mxu0 0.0
    %560 = vmatprep.subr.mxu0 0.0
    %561 = vmatpush1.xpose.msra.mxu0 0.0
    %562 = vmatprep.subr.mxu0 0.0
    %563 = vmatpush1.xpose.msra.mxu0 0.0
    %564 = vmatprep.subr.mxu0 0.0
    %565 = vmatpush1.xpose.msra.mxu0 0.0
    %566 = vmatprep.subr.mxu0 0.0
    %567 = vmatpush1.xpose.msra.mxu0 0.0
    %568 = vmatprep.subr.mxu0 0.0
    %569 = vmatpush1.xpose.msra.mxu0 %v536
    %570 = vmatprep.subr.mxu0 0.0
    %571 = vmatpush2.xpose.msra.mxu0 0.0
    %572 = vmatprep.subr.mxu0 0.0
    %573 = vmatpush2.xpose.msra.mxu0 0.0
    %574 = vmatprep.subr.mxu0 0.0
    %575 = vmatpush2.xpose.msra.mxu0 0.0
    %576 = vmatprep.subr.mxu0 0.0
    %577 = vmatpush2.xpose.msra.mxu0 0.0
    %578 = vmatprep.subr.mxu0 0.0
    %579 = vmatpush2.xpose.msra.mxu0 0.0
    %580 = vmatprep.subr.mxu0 0.0
    %581 = vmatpush2.xpose.msra.mxu0 0.0
    %582 = vmatprep.subr.mxu0 0.0
    %583 = vmatpush2.xpose.msra.mxu0 0.0
    %584 = vmatprep.subr.mxu0 0.0
    %585 = vmatpush2.xpose.msra.mxu0 0.0
    %586 = vmatprep.subr.mxu0 0.0
    %587 = vmatpush2.xpose.msra.mxu0 0.0
    %588 = vmatprep.subr.mxu0 0.0
    %589 = vmatpush2.xpose.msra.mxu0 0.0
    %590 = vmatprep.subr.mxu0 0.0
    %591 = vmatpush2.xpose.msra.mxu0 0.0
    %592 = vmatprep.subr.mxu0 0.0
    %593 = vmatpush2.xpose.msra.mxu0 0.0
    %594 = vmatprep.subr.mxu0 0.0
    %595 = vmatpush2.xpose.msra.mxu0 0.0
    %596 = vmatprep.subr.mxu0 0.0
    %597 = vmatpush2.xpose.msra.mxu0 0.0
    %598 = vmatprep.subr.mxu0 0.0
    %599 = vmatpush2.xpose.msra.mxu0 0.0
    %600 = vmatprep.subr.mxu0 0.0
    %601 = vmatpush2.xpose.msra.mxu0 0.0
    %602 = vmatprep.mubr.f32.mxu0 0.0
    %603 = vmatmul.mubr.f32.gmra.mxu0 %v534
    %v604 = vpop.f32.mrf.mxu0
    %v605 = vadd.f32 0.0, %v604
    %v606 = vpop.f32.mrf.mxu0
    %607 = vdwg.mxu0
    %609 = vrot.lane.b32.xlu0 %v206, 64
    %v610 = vpop.permute.xlu0 %609
    %v611 = vsel %vm225, %v206, 0
    %v613 = vsel %vm225, %v610, 0
    %615 = vmatprep.subr.mxu0 0.0
    %616 = vmatpush1.xpose.msra.mxu0 0.0
    %617 = vmatprep.subr.mxu0 0.0
    %618 = vmatpush1.xpose.msra.mxu0 0.0
    %619 = vmatprep.subr.mxu0 0.0
    %620 = vmatpush1.xpose.msra.mxu0 0.0
    %621 = vmatprep.subr.mxu0 0.0
    %622 = vmatpush1.xpose.msra.mxu0 0.0
    %623 = vmatprep.subr.mxu0 0.0
    %624 = vmatpush1.xpose.msra.mxu0 0.0
    %625 = vmatprep.subr.mxu0 0.0
    %626 = vmatpush1.xpose.msra.mxu0 0.0
    %627 = vmatprep.subr.mxu0 0.0
    %628 = vmatpush1.xpose.msra.mxu0 0.0
    %629 = vmatprep.subr.mxu0 0.0
    %630 = vmatpush1.xpose.msra.mxu0 0.0
    %631 = vmatprep.subr.mxu0 0.0
    %632 = vmatpush1.xpose.msra.mxu0 0.0
    %633 = vmatprep.subr.mxu0 0.0
    %634 = vmatpush1.xpose.msra.mxu0 0.0
    %635 = vmatprep.subr.mxu0 0.0
    %636 = vmatpush1.xpose.msra.mxu0 0.0
    %637 = vmatprep.subr.mxu0 0.0
    %638 = vmatpush1.xpose.msra.mxu0 0.0
    %639 = vmatprep.subr.mxu0 0.0
    %640 = vmatpush1.xpose.msra.mxu0 0.0
    %641 = vmatprep.subr.mxu0 0.0
    %642 = vmatpush1.xpose.msra.mxu0 0.0
    %643 = vmatprep.subr.mxu0 0.0
    %644 = vmatpush1.xpose.msra.mxu0 0.0
    %645 = vmatprep.subr.mxu0 0.0
    %646 = vmatpush1.xpose.msra.mxu0 %v613
    %647 = vmatprep.subr.mxu0 0.0
    %648 = vmatpush2.xpose.msra.mxu0 0.0
    %649 = vmatprep.subr.mxu0 0.0
    %650 = vmatpush2.xpose.msra.mxu0 0.0
    %651 = vmatprep.subr.mxu0 0.0
    %652 = vmatpush2.xpose.msra.mxu0 0.0
    %653 = vmatprep.subr.mxu0 0.0
    %654 = vmatpush2.xpose.msra.mxu0 0.0
    %655 = vmatprep.subr.mxu0 0.0
    %656 = vmatpush2.xpose.msra.mxu0 0.0
    %657 = vmatprep.subr.mxu0 0.0
    %658 = vmatpush2.xpose.msra.mxu0 0.0
    %659 = vmatprep.subr.mxu0 0.0
    %660 = vmatpush2.xpose.msra.mxu0 0.0
    %661 = vmatprep.subr.mxu0 0.0
    %662 = vmatpush2.xpose.msra.mxu0 0.0
    %663 = vmatprep.subr.mxu0 0.0
    %664 = vmatpush2.xpose.msra.mxu0 0.0
    %665 = vmatprep.subr.mxu0 0.0
    %666 = vmatpush2.xpose.msra.mxu0 0.0
    %667 = vmatprep.subr.mxu0 0.0
    %668 = vmatpush2.xpose.msra.mxu0 0.0
    %669 = vmatprep.subr.mxu0 0.0
    %670 = vmatpush2.xpose.msra.mxu0 0.0
    %671 = vmatprep.subr.mxu0 0.0
    %672 = vmatpush2.xpose.msra.mxu0 0.0
    %673 = vmatprep.subr.mxu0 0.0
    %674 = vmatpush2.xpose.msra.mxu0 0.0
    %675 = vmatprep.subr.mxu0 0.0
    %676 = vmatpush2.xpose.msra.mxu0 0.0
    %677 = vmatprep.subr.mxu0 0.0
    %678 = vmatpush2.xpose.msra.mxu0 0.0
    %679 = vmatprep.mubr.f32.mxu0 0.0
    %680 = vmatmul.mubr.f32.gmra.mxu0 %v611
    %v681 = vpop.f32.mrf.mxu0
    %v682 = vadd.f32 0.0, %v681
    %v683 = vpop.f32.mrf.mxu0
    %684 = vdwg.mxu0
    %686 = vrot.lane.b32.xlu0 %v212, 64
    %v687 = vpop.permute.xlu0 %686
    %v688 = vsel %vm225, %v212, 0
    %v690 = vsel %vm225, %v687, 0
    %692 = vmatprep.subr.mxu0 0.0
    %693 = vmatpush1.xpose.msra.mxu0 0.0
    %694 = vmatprep.subr.mxu0 0.0
    %695 = vmatpush1.xpose.msra.mxu0 0.0
    %696 = vmatprep.subr.mxu0 0.0
    %697 = vmatpush1.xpose.msra.mxu0 0.0
    %698 = vmatprep.subr.mxu0 0.0
    %699 = vmatpush1.xpose.msra.mxu0 0.0
    %700 = vmatprep.subr.mxu0 0.0
    %701 = vmatpush1.xpose.msra.mxu0 0.0
    %702 = vmatprep.subr.mxu0 0.0
    %703 = vmatpush1.xpose.msra.mxu0 0.0
    %704 = vmatprep.subr.mxu0 0.0
    %705 = vmatpush1.xpose.msra.mxu0 0.0
    %706 = vmatprep.subr.mxu0 0.0
    %707 = vmatpush1.xpose.msra.mxu0 0.0
    %708 = vmatprep.subr.mxu0 0.0
    %709 = vmatpush1.xpose.msra.mxu0 0.0
    %710 = vmatprep.subr.mxu0 0.0
    %711 = vmatpush1.xpose.msra.mxu0 0.0
    %712 = vmatprep.subr.mxu0 0.0
    %713 = vmatpush1.xpose.msra.mxu0 0.0
    %714 = vmatprep.subr.mxu0 0.0
    %715 = vmatpush1.xpose.msra.mxu0 0.0
    %716 = vmatprep.subr.mxu0 0.0
    %717 = vmatpush1.xpose.msra.mxu0 0.0
    %718 = vmatprep.subr.mxu0 0.0
    %719 = vmatpush1.xpose.msra.mxu0 0.0
    %720 = vmatprep.subr.mxu0 0.0
    %721 = vmatpush1.xpose.msra.mxu0 0.0
    %722 = vmatprep.subr.mxu0 0.0
    %723 = vmatpush1.xpose.msra.mxu0 %v690
    %724 = vmatprep.subr.mxu0 0.0
    %725 = vmatpush2.xpose.msra.mxu0 0.0
    %726 = vmatprep.subr.mxu0 0.0
    %727 = vmatpush2.xpose.msra.mxu0 0.0
    %728 = vmatprep.subr.mxu0 0.0
    %729 = vmatpush2.xpose.msra.mxu0 0.0
    %730 = vmatprep.subr.mxu0 0.0
    %731 = vmatpush2.xpose.msra.mxu0 0.0
    %732 = vmatprep.subr.mxu0 0.0
    %733 = vmatpush2.xpose.msra.mxu0 0.0
    %734 = vmatprep.subr.mxu0 0.0
    %735 = vmatpush2.xpose.msra.mxu0 0.0
    %736 = vmatprep.subr.mxu0 0.0
    %737 = vmatpush2.xpose.msra.mxu0 0.0
    %738 = vmatprep.subr.mxu0 0.0
    %739 = vmatpush2.xpose.msra.mxu0 0.0
    %740 = vmatprep.subr.mxu0 0.0
    %741 = vmatpush2.xpose.msra.mxu0 0.0
    %742 = vmatprep.subr.mxu0 0.0
    %743 = vmatpush2.xpose.msra.mxu0 0.0
    %744 = vmatprep.subr.mxu0 0.0
    %745 = vmatpush2.xpose.msra.mxu0 0.0
    %746 = vmatprep.subr.mxu0 0.0
    %747 = vmatpush2.xpose.msra.mxu0 0.0
    %748 = vmatprep.subr.mxu0 0.0
    %749 = vmatpush2.xpose.msra.mxu0 0.0
    %750 = vmatprep.subr.mxu0 0.0
    %751 = vmatpush2.xpose.msra.mxu0 0.0
    %752 = vmatprep.subr.mxu0 0.0
    %753 = vmatpush2.xpose.msra.mxu0 0.0
    %754 = vmatprep.subr.mxu0 0.0
    %755 = vmatpush2.xpose.msra.mxu0 0.0
    %756 = vmatprep.mubr.f32.mxu0 0.0
    %757 = vmatmul.mubr.f32.gmra.mxu0 %v688
    %v758 = vpop.f32.mrf.mxu0
    %v759 = vadd.f32 0.0, %v758
    %v760 = vpop.f32.mrf.mxu0
    %761 = vdwg.mxu0
    %763 = vrot.lane.b32.xlu0 %v218, 64
    %v764 = vpop.permute.xlu0 %763
    %v765 = vsel %vm225, %v218, 0
    %v767 = vsel %vm225, %v764, 0
    %769 = vmatprep.subr.mxu0 0.0
    %770 = vmatpush1.xpose.msra.mxu0 0.0
    %771 = vmatprep.subr.mxu0 0.0
    %772 = vmatpush1.xpose.msra.mxu0 0.0
    %773 = vmatprep.subr.mxu0 0.0
    %774 = vmatpush1.xpose.msra.mxu0 0.0
    %775 = vmatprep.subr.mxu0 0.0
    %776 = vmatpush1.xpose.msra.mxu0 0.0
    %777 = vmatprep.subr.mxu0 0.0
    %778 = vmatpush1.xpose.msra.mxu0 0.0
    %779 = vmatprep.subr.mxu0 0.0
    %780 = vmatpush1.xpose.msra.mxu0 0.0
    %781 = vmatprep.subr.mxu0 0.0
    %782 = vmatpush1.xpose.msra.mxu0 0.0
    %783 = vmatprep.subr.mxu0 0.0
    %784 = vmatpush1.xpose.msra.mxu0 0.0
    %785 = vmatprep.subr.mxu0 0.0
    %786 = vmatpush1.xpose.msra.mxu0 0.0
    %787 = vmatprep.subr.mxu0 0.0
    %788 = vmatpush1.xpose.msra.mxu0 0.0
    %789 = vmatprep.subr.mxu0 0.0
    %790 = vmatpush1.xpose.msra.mxu0 0.0
    %791 = vmatprep.subr.mxu0 0.0
    %792 = vmatpush1.xpose.msra.mxu0 0.0
    %793 = vmatprep.subr.mxu0 0.0
    %794 = vmatpush1.xpose.msra.mxu0 0.0
    %795 = vmatprep.subr.mxu0 0.0
    %796 = vmatpush1.xpose.msra.mxu0 0.0
    %797 = vmatprep.subr.mxu0 0.0
    %798 = vmatpush1.xpose.msra.mxu0 0.0
    %799 = vmatprep.subr.mxu0 0.0
    %800 = vmatpush1.xpose.msra.mxu0 %v767
    %801 = vmatprep.subr.mxu0 0.0
    %802 = vmatpush2.xpose.msra.mxu0 0.0
    %803 = vmatprep.subr.mxu0 0.0
    %804 = vmatpush2.xpose.msra.mxu0 0.0
    %805 = vmatprep.subr.mxu0 0.0
    %806 = vmatpush2.xpose.msra.mxu0 0.0
    %807 = vmatprep.subr.mxu0 0.0
    %808 = vmatpush2.xpose.msra.mxu0 0.0
    %809 = vmatprep.subr.mxu0 0.0
    %810 = vmatpush2.xpose.msra.mxu0 0.0
    %811 = vmatprep.subr.mxu0 0.0
    %812 = vmatpush2.xpose.msra.mxu0 0.0
    %813 = vmatprep.subr.mxu0 0.0
    %814 = vmatpush2.xpose.msra.mxu0 0.0
    %815 = vmatprep.subr.mxu0 0.0
    %816 = vmatpush2.xpose.msra.mxu0 0.0
    %817 = vmatprep.subr.mxu0 0.0
    %818 = vmatpush2.xpose.msra.mxu0 0.0
    %819 = vmatprep.subr.mxu0 0.0
    %820 = vmatpush2.xpose.msra.mxu0 0.0
    %821 = vmatprep.subr.mxu0 0.0
    %822 = vmatpush2.xpose.msra.mxu0 0.0
    %823 = vmatprep.subr.mxu0 0.0
    %824 = vmatpush2.xpose.msra.mxu0 0.0
    %825 = vmatprep.subr.mxu0 0.0
    %826 = vmatpush2.xpose.msra.mxu0 0.0
    %827 = vmatprep.subr.mxu0 0.0
    %828 = vmatpush2.xpose.msra.mxu0 0.0
    %829 = vmatprep.subr.mxu0 0.0
    %830 = vmatpush2.xpose.msra.mxu0 0.0
    %831 = vmatprep.subr.mxu0 0.0
    %832 = vmatpush2.xpose.msra.mxu0 0.0
    %833 = vmatprep.mubr.f32.mxu0 0.0
    %834 = vmatmul.mubr.f32.gmra.mxu0 %v765
    %v835 = vpop.f32.mrf.mxu0
    %v836 = vadd.f32 0.0, %v835
    %v837 = vpop.f32.mrf.mxu0
    %838 = vdwg.mxu0
    %vm839 = vcmask 64512
    %v840 = vsel %vm839, %v297, -inf
    %841 = vmax.xlane.f32.xlu0 %v840
    %v842 = vpop.xlane.xlu0 %841
    %v843 = vsel %vm839, %v374, -inf
    %844 = vmax.xlane.f32.xlu0 %v843
    %v845 = vpop.xlane.xlu0 %844
    %v846 = vsel %vm839, %v451, -inf
    %847 = vmax.xlane.f32.xlu0 %v846
    %v848 = vpop.xlane.xlu0 %847
    %v849 = vsel %vm839, %v528, -inf
    %850 = vmax.xlane.f32.xlu0 %v849
    %v851 = vpop.xlane.xlu0 %850
    %v852 = vsel %vm839, %v605, -inf
    %853 = vmax.xlane.f32.xlu0 %v852
    %v854 = vpop.xlane.xlu0 %853
    %v855 = vsel %vm839, %v682, -inf
    %856 = vmax.xlane.f32.xlu0 %v855
    %v857 = vpop.xlane.xlu0 %856
    %v858 = vsel %vm839, %v759, -inf
    %859 = vmax.xlane.f32.xlu0 %v858
    %v860 = vpop.xlane.xlu0 %859
    %v861 = vsel %vm839, %v836, -inf
    %862 = vmax.xlane.f32.xlu0 %v861
    %v863 = vpop.xlane.xlu0 %862
    %v864 = vsub.f32 %v297, %v842
    %v865 = vsub.f32 %v374, %v845
    %v866 = vsub.f32 %v451, %v848
    %v867 = vsub.f32 %v528, %v851
    %v868 = vsub.f32 %v605, %v854
    %v869 = vsub.f32 %v682, %v857
    %v870 = vsub.f32 %v759, %v860
    %v871 = vsub.f32 %v836, %v863
    %v872 = vmul.f32 %v864, 1.442695
    %v873 = vpow.pop %v872
    %v874 = vmul.f32 %v865, 1.442695
    %v875 = vpow.pop %v874
    %v876 = vmul.f32 %v866, 1.442695
    %v877 = vpow.pop %v876
    %v878 = vmul.f32 %v867, 1.442695
    %v879 = vpow.pop %v878
    %v880 = vmul.f32 %v868, 1.442695
    %v881 = vpow.pop %v880
    %v882 = vmul.f32 %v869, 1.442695
    %v883 = vpow.pop %v882
    %v884 = vmul.f32 %v870, 1.442695
    %v885 = vpow.pop %v884
    %v886 = vmul.f32 %v871, 1.442695
    %v887 = vpow.pop %v886
    %v888 = vsel %vm839, %v873, 0.0
    %889 = vadd.xlane.f32.xlu0 %v888
    %v890 = vpop.xlane.xlu0 %889
    %v891 = vsel %vm839, %v875, 0.0
    %892 = vadd.xlane.f32.xlu0 %v891
    %v893 = vpop.xlane.xlu0 %892
    %v894 = vsel %vm839, %v877, 0.0
    %895 = vadd.xlane.f32.xlu0 %v894
    %v896 = vpop.xlane.xlu0 %895
    %v897 = vsel %vm839, %v879, 0.0
    %898 = vadd.xlane.f32.xlu0 %v897
    %v899 = vpop.xlane.xlu0 %898
    %v900 = vsel %vm839, %v881, 0.0
    %901 = vadd.xlane.f32.xlu0 %v900
    %v902 = vpop.xlane.xlu0 %901
    %v903 = vsel %vm839, %v883, 0.0
    %904 = vadd.xlane.f32.xlu0 %v903
    %v905 = vpop.xlane.xlu0 %904
    %v906 = vsel %vm839, %v885, 0.0
    %907 = vadd.xlane.f32.xlu0 %v906
    %v908 = vpop.xlane.xlu0 %907
    %v909 = vsel %vm839, %v887, 0.0
    %910 = vadd.xlane.f32.xlu0 %v909
    %v911 = vpop.xlane.xlu0 %910
    %v912 = vrcp.pop %v890
    %v913 = vrcp.pop %v893
    %v914 = vrcp.pop %v896
    %v915 = vrcp.pop %v899
    %v916 = vrcp.pop %v902
    %v917 = vrcp.pop %v905
    %v918 = vrcp.pop %v908
    %v919 = vrcp.pop %v911
    %v920 = vmul.f32 %v873, %v912
    %v921 = vmul.f32 %v875, %v913
    %v922 = vmul.f32 %v877, %v914
    %v923 = vmul.f32 %v879, %v915
    %v924 = vmul.f32 %v881, %v916
    %v925 = vmul.f32 %v883, %v917
    %v926 = vmul.f32 %v885, %v918
    %v927 = vmul.f32 %v887, %v919
    %v929 = vsel %vm839, %v920, 0
    %931 = vmatprep.subr.mxu0 0.0
    %932 = vmatpush1.msra.mxu0 0.0
    %933 = vmatprep.subr.mxu0 0.0
    %934 = vmatpush1.msra.mxu0 0.0
    %935 = vmatprep.subr.mxu0 0.0
    %936 = vmatpush1.msra.mxu0 0.0
    %937 = vmatprep.subr.mxu0 0.0
    %938 = vmatpush1.msra.mxu0 0.0
    %939 = vmatprep.subr.mxu0 0.0
    %940 = vmatpush1.msra.mxu0 0.0
    %941 = vmatprep.subr.mxu0 0.0
    %942 = vmatpush1.msra.mxu0 0.0
    %943 = vmatprep.subr.mxu0 0.0
    %944 = vmatpush1.msra.mxu0 0.0
    %945 = vmatprep.subr.mxu0 0.0
    %946 = vmatpush1.msra.mxu0 0.0
    %947 = vmatprep.subr.mxu0 0.0
    %948 = vmatpush1.msra.mxu0 0.0
    %949 = vmatprep.subr.mxu0 0.0
    %950 = vmatpush1.msra.mxu0 0.0
    %951 = vmatprep.subr.mxu0 0.0
    %952 = vmatpush1.msra.mxu0 0.0
    %953 = vmatprep.subr.mxu0 0.0
    %954 = vmatpush1.msra.mxu0 0.0
    %955 = vmatprep.subr.mxu0 0.0
    %956 = vmatpush1.msra.mxu0 0.0
    %957 = vmatprep.subr.mxu0 0.0
    %958 = vmatpush1.msra.mxu0 0.0
    %959 = vmatprep.subr.mxu0 0.0
    %960 = vmatpush1.msra.mxu0 0.0
    %961 = vmatprep.subr.mxu0 0.0
    %962 = vmatpush1.msra.mxu0 %v178
    %963 = vmatprep.subr.mxu0 0.0
    %964 = vmatpush2.msra.mxu0 0.0
    %965 = vmatprep.subr.mxu0 0.0
    %966 = vmatpush2.msra.mxu0 0.0
    %967 = vmatprep.subr.mxu0 0.0
    %968 = vmatpush2.msra.mxu0 0.0
    %969 = vmatprep.subr.mxu0 0.0
    %970 = vmatpush2.msra.mxu0 0.0
    %971 = vmatprep.subr.mxu0 0.0
    %972 = vmatpush2.msra.mxu0 0.0
    %973 = vmatprep.subr.mxu0 0.0
    %974 = vmatpush2.msra.mxu0 0.0
    %975 = vmatprep.subr.mxu0 0.0
    %976 = vmatpush2.msra.mxu0 0.0
    %977 = vmatprep.subr.mxu0 0.0
    %978 = vmatpush2.msra.mxu0 0.0
    %979 = vmatprep.subr.mxu0 0.0
    %980 = vmatpush2.msra.mxu0 0.0
    %981 = vmatprep.subr.mxu0 0.0
    %982 = vmatpush2.msra.mxu0 0.0
    %983 = vmatprep.subr.mxu0 0.0
    %984 = vmatpush2.msra.mxu0 0.0
    %985 = vmatprep.subr.mxu0 0.0
    %986 = vmatpush2.msra.mxu0 0.0
    %987 = vmatprep.subr.mxu0 0.0
    %988 = vmatpush2.msra.mxu0 0.0
    %989 = vmatprep.subr.mxu0 0.0
    %990 = vmatpush2.msra.mxu0 0.0
    %991 = vmatprep.subr.mxu0 0.0
    %992 = vmatpush2.msra.mxu0 0.0
    %993 = vmatprep.subr.mxu0 0.0
    %994 = vmatpush2.msra.mxu0 0.0
    %995 = vmatprep.mubr.f32.mxu0 0.0
    %996 = vmatmul.mubr.f32.gmra.mxu0 %v929
    %v997 = vpop.f32.mrf.mxu0
    %v998 = vadd.f32 0.0, %v997
    %v999 = vpop.f32.mrf.mxu0
    %1000 = vdwg.mxu0
    %v1002 = vsel %vm839, %v921, 0
    %1004 = vmatprep.subr.mxu0 0.0
    %1005 = vmatpush1.msra.mxu0 0.0
    %1006 = vmatprep.subr.mxu0 0.0
    %1007 = vmatpush1.msra.mxu0 0.0
    %1008 = vmatprep.subr.mxu0 0.0
    %1009 = vmatpush1.msra.mxu0 0.0
    %1010 = vmatprep.subr.mxu0 0.0
    %1011 = vmatpush1.msra.mxu0 0.0
    %1012 = vmatprep.subr.mxu0 0.0
    %1013 = vmatpush1.msra.mxu0 0.0
    %1014 = vmatprep.subr.mxu0 0.0
    %1015 = vmatpush1.msra.mxu0 0.0
    %1016 = vmatprep.subr.mxu0 0.0
    %1017 = vmatpush1.msra.mxu0 0.0
    %1018 = vmatprep.subr.mxu0 0.0
    %1019 = vmatpush1.msra.mxu0 0.0
    %1020 = vmatprep.subr.mxu0 0.0
    %1021 = vmatpush1.msra.mxu0 0.0
    %1022 = vmatprep.subr.mxu0 0.0
    %1023 = vmatpush1.msra.mxu0 0.0
    %1024 = vmatprep.subr.mxu0 0.0
    %1025 = vmatpush1.msra.mxu0 0.0
    %1026 = vmatprep.subr.mxu0 0.0
    %1027 = vmatpush1.msra.mxu0 0.0
    %1028 = vmatprep.subr.mxu0 0.0
    %1029 = vmatpush1.msra.mxu0 0.0
    %1030 = vmatprep.subr.mxu0 0.0
    %1031 = vmatpush1.msra.mxu0 0.0
    %1032 = vmatprep.subr.mxu0 0.0
    %1033 = vmatpush1.msra.mxu0 0.0
    %1034 = vmatprep.subr.mxu0 0.0
    %1035 = vmatpush1.msra.mxu0 %v184
    %1036 = vmatprep.subr.mxu0 0.0
    %1037 = vmatpush2.msra.mxu0 0.0
    %1038 = vmatprep.subr.mxu0 0.0
    %1039 = vmatpush2.msra.mxu0 0.0
    %1040 = vmatprep.subr.mxu0 0.0
    %1041 = vmatpush2.msra.mxu0 0.0
    %1042 = vmatprep.subr.mxu0 0.0
    %1043 = vmatpush2.msra.mxu0 0.0
    %1044 = vmatprep.subr.mxu0 0.0
    %1045 = vmatpush2.msra.mxu0 0.0
    %1046 = vmatprep.subr.mxu0 0.0
    %1047 = vmatpush2.msra.mxu0 0.0
    %1048 = vmatprep.subr.mxu0 0.0
    %1049 = vmatpush2.msra.mxu0 0.0
    %1050 = vmatprep.subr.mxu0 0.0
    %1051 = vmatpush2.msra.mxu0 0.0
    %1052 = vmatprep.subr.mxu0 0.0
    %1053 = vmatpush2.msra.mxu0 0.0
    %1054 = vmatprep.subr.mxu0 0.0
    %1055 = vmatpush2.msra.mxu0 0.0
    %1056 = vmatprep.subr.mxu0 0.0
    %1057 = vmatpush2.msra.mxu0 0.0
    %1058 = vmatprep.subr.mxu0 0.0
    %1059 = vmatpush2.msra.mxu0 0.0
    %1060 = vmatprep.subr.mxu0 0.0
    %1061 = vmatpush2.msra.mxu0 0.0
    %1062 = vmatprep.subr.mxu0 0.0
    %1063 = vmatpush2.msra.mxu0 0.0
    %1064 = vmatprep.subr.mxu0 0.0
    %1065 = vmatpush2.msra.mxu0 0.0
    %1066 = vmatprep.subr.mxu0 0.0
    %1067 = vmatpush2.msra.mxu0 0.0
    %1068 = vmatprep.mubr.f32.mxu0 0.0
    %1069 = vmatmul.mubr.f32.gmra.mxu0 %v1002
    %v1070 = vpop.f32.mrf.mxu0
    %v1071 = vadd.f32 0.0, %v1070
    %v1072 = vpop.f32.mrf.mxu0
    %1073 = vdwg.mxu0
    %v1075 = vsel %vm839, %v922, 0
    %1077 = vmatprep.subr.mxu0 0.0
    %1078 = vmatpush1.msra.mxu0 0.0
    %1079 = vmatprep.subr.mxu0 0.0
    %1080 = vmatpush1.msra.mxu0 0.0
    %1081 = vmatprep.subr.mxu0 0.0
    %1082 = vmatpush1.msra.mxu0 0.0
    %1083 = vmatprep.subr.mxu0 0.0
    %1084 = vmatpush1.msra.mxu0 0.0
    %1085 = vmatprep.subr.mxu0 0.0
    %1086 = vmatpush1.msra.mxu0 0.0
    %1087 = vmatprep.subr.mxu0 0.0
    %1088 = vmatpush1.msra.mxu0 0.0
    %1089 = vmatprep.subr.mxu0 0.0
    %1090 = vmatpush1.msra.mxu0 0.0
    %1091 = vmatprep.subr.mxu0 0.0
    %1092 = vmatpush1.msra.mxu0 0.0
    %1093 = vmatprep.subr.mxu0 0.0
    %1094 = vmatpush1.msra.mxu0 0.0
    %1095 = vmatprep.subr.mxu0 0.0
    %1096 = vmatpush1.msra.mxu0 0.0
    %1097 = vmatprep.subr.mxu0 0.0
    %1098 = vmatpush1.msra.mxu0 0.0
    %1099 = vmatprep.subr.mxu0 0.0
    %1100 = vmatpush1.msra.mxu0 0.0
    %1101 = vmatprep.subr.mxu0 0.0
    %1102 = vmatpush1.msra.mxu0 0.0
    %1103 = vmatprep.subr.mxu0 0.0
    %1104 = vmatpush1.msra.mxu0 0.0
    %1105 = vmatprep.subr.mxu0 0.0
    %1106 = vmatpush1.msra.mxu0 0.0
    %1107 = vmatprep.subr.mxu0 0.0
    %1108 = vmatpush1.msra.mxu0 %v190
    %1109 = vmatprep.subr.mxu0 0.0
    %1110 = vmatpush2.msra.mxu0 0.0
    %1111 = vmatprep.subr.mxu0 0.0
    %1112 = vmatpush2.msra.mxu0 0.0
    %1113 = vmatprep.subr.mxu0 0.0
    %1114 = vmatpush2.msra.mxu0 0.0
    %1115 = vmatprep.subr.mxu0 0.0
    %1116 = vmatpush2.msra.mxu0 0.0
    %1117 = vmatprep.subr.mxu0 0.0
    %1118 = vmatpush2.msra.mxu0 0.0
    %1119 = vmatprep.subr.mxu0 0.0
    %1120 = vmatpush2.msra.mxu0 0.0
    %1121 = vmatprep.subr.mxu0 0.0
    %1122 = vmatpush2.msra.mxu0 0.0
    %1123 = vmatprep.subr.mxu0 0.0
    %1124 = vmatpush2.msra.mxu0 0.0
    %1125 = vmatprep.subr.mxu0 0.0
    %1126 = vmatpush2.msra.mxu0 0.0
    %1127 = vmatprep.subr.mxu0 0.0
    %1128 = vmatpush2.msra.mxu0 0.0
    %1129 = vmatprep.subr.mxu0 0.0
    %1130 = vmatpush2.msra.mxu0 0.0
    %1131 = vmatprep.subr.mxu0 0.0
    %1132 = vmatpush2.msra.mxu0 0.0
    %1133 = vmatprep.subr.mxu0 0.0
    %1134 = vmatpush2.msra.mxu0 0.0
    %1135 = vmatprep.subr.mxu0 0.0
    %1136 = vmatpush2.msra.mxu0 0.0
    %1137 = vmatprep.subr.mxu0 0.0
    %1138 = vmatpush2.msra.mxu0 0.0
    %1139 = vmatprep.subr.mxu0 0.0
    %1140 = vmatpush2.msra.mxu0 0.0
    %1141 = vmatprep.mubr.f32.mxu0 0.0
    %1142 = vmatmul.mubr.f32.gmra.mxu0 %v1075
    %v1143 = vpop.f32.mrf.mxu0
    %v1144 = vadd.f32 0.0, %v1143
    %v1145 = vpop.f32.mrf.mxu0
    %1146 = vdwg.mxu0
    %v1148 = vsel %vm839, %v923, 0
    %1150 = vmatprep.subr.mxu0 0.0
    %1151 = vmatpush1.msra.mxu0 0.0
    %1152 = vmatprep.subr.mxu0 0.0
    %1153 = vmatpush1.msra.mxu0 0.0
    %1154 = vmatprep.subr.mxu0 0.0
    %1155 = vmatpush1.msra.mxu0 0.0
    %1156 = vmatprep.subr.mxu0 0.0
    %1157 = vmatpush1.msra.mxu0 0.0
    %1158 = vmatprep.subr.mxu0 0.0
    %1159 = vmatpush1.msra.mxu0 0.0
    %1160 = vmatprep.subr.mxu0 0.0
    %1161 = vmatpush1.msra.mxu0 0.0
    %1162 = vmatprep.subr.mxu0 0.0
    %1163 = vmatpush1.msra.mxu0 0.0
    %1164 = vmatprep.subr.mxu0 0.0
    %1165 = vmatpush1.msra.mxu0 0.0
    %1166 = vmatprep.subr.mxu0 0.0
    %1167 = vmatpush1.msra.mxu0 0.0
    %1168 = vmatprep.subr.mxu0 0.0
    %1169 = vmatpush1.msra.mxu0 0.0
    %1170 = vmatprep.subr.mxu0 0.0
    %1171 = vmatpush1.msra.mxu0 0.0
    %1172 = vmatprep.subr.mxu0 0.0
    %1173 = vmatpush1.msra.mxu0 0.0
    %1174 = vmatprep.subr.mxu0 0.0
    %1175 = vmatpush1.msra.mxu0 0.0
    %1176 = vmatprep.subr.mxu0 0.0
    %1177 = vmatpush1.msra.mxu0 0.0
    %1178 = vmatprep.subr.mxu0 0.0
    %1179 = vmatpush1.msra.mxu0 0.0
    %1180 = vmatprep.subr.mxu0 0.0
    %1181 = vmatpush1.msra.mxu0 %v196
    %1182 = vmatprep.subr.mxu0 0.0
    %1183 = vmatpush2.msra.mxu0 0.0
    %1184 = vmatprep.subr.mxu0 0.0
    %1185 = vmatpush2.msra.mxu0 0.0
    %1186 = vmatprep.subr.mxu0 0.0
    %1187 = vmatpush2.msra.mxu0 0.0
    %1188 = vmatprep.subr.mxu0 0.0
    %1189 = vmatpush2.msra.mxu0 0.0
    %1190 = vmatprep.subr.mxu0 0.0
    %1191 = vmatpush2.msra.mxu0 0.0
    %1192 = vmatprep.subr.mxu0 0.0
    %1193 = vmatpush2.msra.mxu0 0.0
    %1194 = vmatprep.subr.mxu0 0.0
    %1195 = vmatpush2.msra.mxu0 0.0
    %1196 = vmatprep.subr.mxu0 0.0
    %1197 = vmatpush2.msra.mxu0 0.0
    %1198 = vmatprep.subr.mxu0 0.0
    %1199 = vmatpush2.msra.mxu0 0.0
    %1200 = vmatprep.subr.mxu0 0.0
    %1201 = vmatpush2.msra.mxu0 0.0
    %1202 = vmatprep.subr.mxu0 0.0
    %1203 = vmatpush2.msra.mxu0 0.0
    %1204 = vmatprep.subr.mxu0 0.0
    %1205 = vmatpush2.msra.mxu0 0.0
    %1206 = vmatprep.subr.mxu0 0.0
    %1207 = vmatpush2.msra.mxu0 0.0
    %1208 = vmatprep.subr.mxu0 0.0
    %1209 = vmatpush2.msra.mxu0 0.0
    %1210 = vmatprep.subr.mxu0 0.0
    %1211 = vmatpush2.msra.mxu0 0.0
    %1212 = vmatprep.subr.mxu0 0.0
    %1213 = vmatpush2.msra.mxu0 0.0
    %1214 = vmatprep.mubr.f32.mxu0 0.0
    %1215 = vmatmul.mubr.f32.gmra.mxu0 %v1148
    %v1216 = vpop.f32.mrf.mxu0
    %v1217 = vadd.f32 0.0, %v1216
    %v1218 = vpop.f32.mrf.mxu0
    %1219 = vdwg.mxu0
    %v1221 = vsel %vm839, %v924, 0
    %1223 = vmatprep.subr.mxu0 0.0
    %1224 = vmatpush1.msra.mxu0 0.0
    %1225 = vmatprep.subr.mxu0 0.0
    %1226 = vmatpush1.msra.mxu0 0.0
    %1227 = vmatprep.subr.mxu0 0.0
    %1228 = vmatpush1.msra.mxu0 0.0
    %1229 = vmatprep.subr.mxu0 0.0
    %1230 = vmatpush1.msra.mxu0 0.0
    %1231 = vmatprep.subr.mxu0 0.0
    %1232 = vmatpush1.msra.mxu0 0.0
    %1233 = vmatprep.subr.mxu0 0.0
    %1234 = vmatpush1.msra.mxu0 0.0
    %1235 = vmatprep.subr.mxu0 0.0
    %1236 = vmatpush1.msra.mxu0 0.0
    %1237 = vmatprep.subr.mxu0 0.0
    %1238 = vmatpush1.msra.mxu0 0.0
    %1239 = vmatprep.subr.mxu0 0.0
    %1240 = vmatpush1.msra.mxu0 0.0
    %1241 = vmatprep.subr.mxu0 0.0
    %1242 = vmatpush1.msra.mxu0 0.0
    %1243 = vmatprep.subr.mxu0 0.0
    %1244 = vmatpush1.msra.mxu0 0.0
    %1245 = vmatprep.subr.mxu0 0.0
    %1246 = vmatpush1.msra.mxu0 0.0
    %1247 = vmatprep.subr.mxu0 0.0
    %1248 = vmatpush1.msra.mxu0 0.0
    %1249 = vmatprep.subr.mxu0 0.0
    %1250 = vmatpush1.msra.mxu0 0.0
    %1251 = vmatprep.subr.mxu0 0.0
    %1252 = vmatpush1.msra.mxu0 0.0
    %1253 = vmatprep.subr.mxu0 0.0
    %1254 = vmatpush1.msra.mxu0 %v202
    %1255 = vmatprep.subr.mxu0 0.0
    %1256 = vmatpush2.msra.mxu0 0.0
    %1257 = vmatprep.subr.mxu0 0.0
    %1258 = vmatpush2.msra.mxu0 0.0
    %1259 = vmatprep.subr.mxu0 0.0
    %1260 = vmatpush2.msra.mxu0 0.0
    %1261 = vmatprep.subr.mxu0 0.0
    %1262 = vmatpush2.msra.mxu0 0.0
    %1263 = vmatprep.subr.mxu0 0.0
    %1264 = vmatpush2.msra.mxu0 0.0
    %1265 = vmatprep.subr.mxu0 0.0
    %1266 = vmatpush2.msra.mxu0 0.0
    %1267 = vmatprep.subr.mxu0 0.0
    %1268 = vmatpush2.msra.mxu0 0.0
    %1269 = vmatprep.subr.mxu0 0.0
    %1270 = vmatpush2.msra.mxu0 0.0
    %1271 = vmatprep.subr.mxu0 0.0
    %1272 = vmatpush2.msra.mxu0 0.0
    %1273 = vmatprep.subr.mxu0 0.0
    %1274 = vmatpush2.msra.mxu0 0.0
    %1275 = vmatprep.subr.mxu0 0.0
    %1276 = vmatpush2.msra.mxu0 0.0
    %1277 = vmatprep.subr.mxu0 0.0
    %1278 = vmatpush2.msra.mxu0 0.0
    %1279 = vmatprep.subr.mxu0 0.0
    %1280 = vmatpush2.msra.mxu0 0.0
    %1281 = vmatprep.subr.mxu0 0.0
    %1282 = vmatpush2.msra.mxu0 0.0
    %1283 = vmatprep.subr.mxu0 0.0
    %1284 = vmatpush2.msra.mxu0 0.0
    %1285 = vmatprep.subr.mxu0 0.0
    %1286 = vmatpush2.msra.mxu0 0.0
    %1287 = vmatprep.mubr.f32.mxu0 0.0
    %1288 = vmatmul.mubr.f32.gmra.mxu0 %v1221
    %v1289 = vpop.f32.mrf.mxu0
    %v1290 = vadd.f32 0.0, %v1289
    %v1291 = vpop.f32.mrf.mxu0
    %1292 = vdwg.mxu0
    %v1294 = vsel %vm839, %v925, 0
    %1296 = vmatprep.subr.mxu0 0.0
    %1297 = vmatpush1.msra.mxu0 0.0
    %1298 = vmatprep.subr.mxu0 0.0
    %1299 = vmatpush1.msra.mxu0 0.0
    %1300 = vmatprep.subr.mxu0 0.0
    %1301 = vmatpush1.msra.mxu0 0.0
    %1302 = vmatprep.subr.mxu0 0.0
    %1303 = vmatpush1.msra.mxu0 0.0
    %1304 = vmatprep.subr.mxu0 0.0
    %1305 = vmatpush1.msra.mxu0 0.0
    %1306 = vmatprep.subr.mxu0 0.0
    %1307 = vmatpush1.msra.mxu0 0.0
    %1308 = vmatprep.subr.mxu0 0.0
    %1309 = vmatpush1.msra.mxu0 0.0
    %1310 = vmatprep.subr.mxu0 0.0
    %1311 = vmatpush1.msra.mxu0 0.0
    %1312 = vmatprep.subr.mxu0 0.0
    %1313 = vmatpush1.msra.mxu0 0.0
    %1314 = vmatprep.subr.mxu0 0.0
    %1315 = vmatpush1.msra.mxu0 0.0
    %1316 = vmatprep.subr.mxu0 0.0
    %1317 = vmatpush1.msra.mxu0 0.0
    %1318 = vmatprep.subr.mxu0 0.0
    %1319 = vmatpush1.msra.mxu0 0.0
    %1320 = vmatprep.subr.mxu0 0.0
    %1321 = vmatpush1.msra.mxu0 0.0
    %1322 = vmatprep.subr.mxu0 0.0
    %1323 = vmatpush1.msra.mxu0 0.0
    %1324 = vmatprep.subr.mxu0 0.0
    %1325 = vmatpush1.msra.mxu0 0.0
    %1326 = vmatprep.subr.mxu0 0.0
    %1327 = vmatpush1.msra.mxu0 %v208
    %1328 = vmatprep.subr.mxu0 0.0
    %1329 = vmatpush2.msra.mxu0 0.0
    %1330 = vmatprep.subr.mxu0 0.0
    %1331 = vmatpush2.msra.mxu0 0.0
    %1332 = vmatprep.subr.mxu0 0.0
    %1333 = vmatpush2.msra.mxu0 0.0
    %1334 = vmatprep.subr.mxu0 0.0
    %1335 = vmatpush2.msra.mxu0 0.0
    %1336 = vmatprep.subr.mxu0 0.0
    %1337 = vmatpush2.msra.mxu0 0.0
    %1338 = vmatprep.subr.mxu0 0.0
    %1339 = vmatpush2.msra.mxu0 0.0
    %1340 = vmatprep.subr.mxu0 0.0
    %1341 = vmatpush2.msra.mxu0 0.0
    %1342 = vmatprep.subr.mxu0 0.0
    %1343 = vmatpush2.msra.mxu0 0.0
    %1344 = vmatprep.subr.mxu0 0.0
    %1345 = vmatpush2.msra.mxu0 0.0
    %1346 = vmatprep.subr.mxu0 0.0
    %1347 = vmatpush2.msra.mxu0 0.0
    %1348 = vmatprep.subr.mxu0 0.0
    %1349 = vmatpush2.msra.mxu0 0.0
    %1350 = vmatprep.subr.mxu0 0.0
    %1351 = vmatpush2.msra.mxu0 0.0
    %1352 = vmatprep.subr.mxu0 0.0
    %1353 = vmatpush2.msra.mxu0 0.0
    %1354 = vmatprep.subr.mxu0 0.0
    %1355 = vmatpush2.msra.mxu0 0.0
    %1356 = vmatprep.subr.mxu0 0.0
    %1357 = vmatpush2.msra.mxu0 0.0
    %1358 = vmatprep.subr.mxu0 0.0
    %1359 = vmatpush2.msra.mxu0 0.0
    %1360 = vmatprep.mubr.f32.mxu0 0.0
    %1361 = vmatmul.mubr.f32.gmra.mxu0 %v1294
    %v1362 = vpop.f32.mrf.mxu0
    %v1363 = vadd.f32 0.0, %v1362
    %v1364 = vpop.f32.mrf.mxu0
    %1365 = vdwg.mxu0
    %v1367 = vsel %vm839, %v926, 0
    %1369 = vmatprep.subr.mxu0 0.0
    %1370 = vmatpush1.msra.mxu0 0.0
    %1371 = vmatprep.subr.mxu0 0.0
    %1372 = vmatpush1.msra.mxu0 0.0
    %1373 = vmatprep.subr.mxu0 0.0
    %1374 = vmatpush1.msra.mxu0 0.0
    %1375 = vmatprep.subr.mxu0 0.0
    %1376 = vmatpush1.msra.mxu0 0.0
    %1377 = vmatprep.subr.mxu0 0.0
    %1378 = vmatpush1.msra.mxu0 0.0
    %1379 = vmatprep.subr.mxu0 0.0
    %1380 = vmatpush1.msra.mxu0 0.0
    %1381 = vmatprep.subr.mxu0 0.0
    %1382 = vmatpush1.msra.mxu0 0.0
    %1383 = vmatprep.subr.mxu0 0.0
    %1384 = vmatpush1.msra.mxu0 0.0
    %1385 = vmatprep.subr.mxu0 0.0
    %1386 = vmatpush1.msra.mxu0 0.0
    %1387 = vmatprep.subr.mxu0 0.0
    %1388 = vmatpush1.msra.mxu0 0.0
    %1389 = vmatprep.subr.mxu0 0.0
    %1390 = vmatpush1.msra.mxu0 0.0
    %1391 = vmatprep.subr.mxu0 0.0
    %1392 = vmatpush1.msra.mxu0 0.0
    %1393 = vmatprep.subr.mxu0 0.0
    %1394 = vmatpush1.msra.mxu0 0.0
    %1395 = vmatprep.subr.mxu0 0.0
    %1396 = vmatpush1.msra.mxu0 0.0
    %1397 = vmatprep.subr.mxu0 0.0
    %1398 = vmatpush1.msra.mxu0 0.0
    %1399 = vmatprep.subr.mxu0 0.0
    %1400 = vmatpush1.msra.mxu0 %v214
    %1401 = vmatprep.subr.mxu0 0.0
    %1402 = vmatpush2.msra.mxu0 0.0
    %1403 = vmatprep.subr.mxu0 0.0
    %1404 = vmatpush2.msra.mxu0 0.0
    %1405 = vmatprep.subr.mxu0 0.0
    %1406 = vmatpush2.msra.mxu0 0.0
    %1407 = vmatprep.subr.mxu0 0.0
    %1408 = vmatpush2.msra.mxu0 0.0
    %1409 = vmatprep.subr.mxu0 0.0
    %1410 = vmatpush2.msra.mxu0 0.0
    %1411 = vmatprep.subr.mxu0 0.0
    %1412 = vmatpush2.msra.mxu0 0.0
    %1413 = vmatprep.subr.mxu0 0.0
    %1414 = vmatpush2.msra.mxu0 0.0
    %1415 = vmatprep.subr.mxu0 0.0
    %1416 = vmatpush2.msra.mxu0 0.0
    %1417 = vmatprep.subr.mxu0 0.0
    %1418 = vmatpush2.msra.mxu0 0.0
    %1419 = vmatprep.subr.mxu0 0.0
    %1420 = vmatpush2.msra.mxu0 0.0
    %1421 = vmatprep.subr.mxu0 0.0
    %1422 = vmatpush2.msra.mxu0 0.0
    %1423 = vmatprep.subr.mxu0 0.0
    %1424 = vmatpush2.msra.mxu0 0.0
    %1425 = vmatprep.subr.mxu0 0.0
    %1426 = vmatpush2.msra.mxu0 0.0
    %1427 = vmatprep.subr.mxu0 0.0
    %1428 = vmatpush2.msra.mxu0 0.0
    %1429 = vmatprep.subr.mxu0 0.0
    %1430 = vmatpush2.msra.mxu0 0.0
    %1431 = vmatprep.subr.mxu0 0.0
    %1432 = vmatpush2.msra.mxu0 0.0
    %1433 = vmatprep.mubr.f32.mxu0 0.0
    %1434 = vmatmul.mubr.f32.gmra.mxu0 %v1367
    %v1435 = vpop.f32.mrf.mxu0
    %v1436 = vadd.f32 0.0, %v1435
    %v1437 = vpop.f32.mrf.mxu0
    %1438 = vdwg.mxu0
    %v1440 = vsel %vm839, %v927, 0
    %1442 = vmatprep.subr.mxu0 0.0
    %1443 = vmatpush1.msra.mxu0 0.0
    %1444 = vmatprep.subr.mxu0 0.0
    %1445 = vmatpush1.msra.mxu0 0.0
    %1446 = vmatprep.subr.mxu0 0.0
    %1447 = vmatpush1.msra.mxu0 0.0
    %1448 = vmatprep.subr.mxu0 0.0
    %1449 = vmatpush1.msra.mxu0 0.0
    %1450 = vmatprep.subr.mxu0 0.0
    %1451 = vmatpush1.msra.mxu0 0.0
    %1452 = vmatprep.subr.mxu0 0.0
    %1453 = vmatpush1.msra.mxu0 0.0
    %1454 = vmatprep.subr.mxu0 0.0
    %1455 = vmatpush1.msra.mxu0 0.0
    %1456 = vmatprep.subr.mxu0 0.0
    %1457 = vmatpush1.msra.mxu0 0.0
    %1458 = vmatprep.subr.mxu0 0.0
    %1459 = vmatpush1.msra.mxu0 0.0
    %1460 = vmatprep.subr.mxu0 0.0
    %1461 = vmatpush1.msra.mxu0 0.0
    %1462 = vmatprep.subr.mxu0 0.0
    %1463 = vmatpush1.msra.mxu0 0.0
    %1464 = vmatprep.subr.mxu0 0.0
    %1465 = vmatpush1.msra.mxu0 0.0
    %1466 = vmatprep.subr.mxu0 0.0
    %1467 = vmatpush1.msra.mxu0 0.0
    %1468 = vmatprep.subr.mxu0 0.0
    %1469 = vmatpush1.msra.mxu0 0.0
    %1470 = vmatprep.subr.mxu0 0.0
    %1471 = vmatpush1.msra.mxu0 0.0
    %1472 = vmatprep.subr.mxu0 0.0
    %1473 = vmatpush1.msra.mxu0 %v220
    %1474 = vmatprep.subr.mxu0 0.0
    %1475 = vmatpush2.msra.mxu0 0.0
    %1476 = vmatprep.subr.mxu0 0.0
    %1477 = vmatpush2.msra.mxu0 0.0
    %1478 = vmatprep.subr.mxu0 0.0
    %1479 = vmatpush2.msra.mxu0 0.0
    %1480 = vmatprep.subr.mxu0 0.0
    %1481 = vmatpush2.msra.mxu0 0.0
    %1482 = vmatprep.subr.mxu0 0.0
    %1483 = vmatpush2.msra.mxu0 0.0
    %1484 = vmatprep.subr.mxu0 0.0
    %1485 = vmatpush2.msra.mxu0 0.0
    %1486 = vmatprep.subr.mxu0 0.0
    %1487 = vmatpush2.msra.mxu0 0.0
    %1488 = vmatprep.subr.mxu0 0.0
    %1489 = vmatpush2.msra.mxu0 0.0
    %1490 = vmatprep.subr.mxu0 0.0
    %1491 = vmatpush2.msra.mxu0 0.0
    %1492 = vmatprep.subr.mxu0 0.0
    %1493 = vmatpush2.msra.mxu0 0.0
    %1494 = vmatprep.subr.mxu0 0.0
    %1495 = vmatpush2.msra.mxu0 0.0
    %1496 = vmatprep.subr.mxu0 0.0
    %1497 = vmatpush2.msra.mxu0 0.0
    %1498 = vmatprep.subr.mxu0 0.0
    %1499 = vmatpush2.msra.mxu0 0.0
    %1500 = vmatprep.subr.mxu0 0.0
    %1501 = vmatpush2.msra.mxu0 0.0
    %1502 = vmatprep.subr.mxu0 0.0
    %1503 = vmatpush2.msra.mxu0 0.0
    %1504 = vmatprep.subr.mxu0 0.0
    %1505 = vmatpush2.msra.mxu0 0.0
    %1506 = vmatprep.mubr.f32.mxu0 0.0
    %1507 = vmatmul.mubr.f32.gmra.mxu0 %v1440
    %v1508 = vpop.f32.mrf.mxu0
    %v1509 = vadd.f32 0.0, %v1508
    %v1510 = vpop.f32.mrf.mxu0
    %1511 = vdwg.mxu0
    %v1512 = vld [vmem:[#allocation4] sm:$0xff]
    %v1513 = vld [vmem:[#allocation4 + $0x8] sm:$0xff]
    %v1514 = vld [vmem:[#allocation4 + $0x10] sm:$0xff]
    %v1515 = vld [vmem:[#allocation4 + $0x18] sm:$0xff]
    %v1516 = vld [vmem:[#allocation4 + $0x20] sm:$0xff]
    %v1517 = vld [vmem:[#allocation4 + $0x28] sm:$0xff]
    %v1518 = vld [vmem:[#allocation4 + $0x30] sm:$0xff]
    %v1519 = vld [vmem:[#allocation4 + $0x38] sm:$0xff]
    %v1520 = vld [vmem:[%s4] sm:$0x1]
    %v1522 = vlaneseq
    %v1523 = vshrl.u32 %v1522, 7
    %v1524 = vsub.s32 0, %v1523
    %v1525 = vrot.slane %v1520, %v1524
    %v1528 = vsel %vm225, %v998, 0
    %v1531 = vsel %vm225, %v1071, 0
    %v1534 = vsel %vm225, %v1144, 0
    %v1537 = vsel %vm225, %v1217, 0
    %v1540 = vsel %vm225, %v1290, 0
    %v1543 = vsel %vm225, %v1363, 0
    %v1546 = vsel %vm225, %v1436, 0
    %v1549 = vsel %vm225, %v1509, 0
    %1551 = vmatprep.subr.mxu0 0.0
    %1552 = vmatpush1.msra.mxu0 0.0
    %1553 = vmatprep.subr.mxu0 0.0
    %1554 = vmatpush1.msra.mxu0 0.0
    %1555 = vmatprep.subr.mxu0 0.0
    %1556 = vmatpush1.msra.mxu0 0.0
    %1557 = vmatprep.subr.mxu0 0.0
    %1558 = vmatpush1.msra.mxu0 0.0
    %1559 = vmatprep.subr.mxu0 0.0
    %1560 = vmatpush1.msra.mxu0 0.0
    %1561 = vmatprep.subr.mxu0 0.0
    %1562 = vmatpush1.msra.mxu0 0.0
    %1563 = vmatprep.subr.mxu0 0.0
    %1564 = vmatpush1.msra.mxu0 0.0
    %1565 = vmatprep.subr.mxu0 0.0
    %1566 = vmatpush1.msra.mxu0 0.0
    %1567 = vmatprep.subr.mxu0 0.0
    %1568 = vmatpush1.msra.mxu0 %v1519
    %1569 = vmatprep.subr.mxu0 0.0
    %1570 = vmatpush1.msra.mxu0 %v1518
    %1571 = vmatprep.subr.mxu0 0.0
    %1572 = vmatpush1.msra.mxu0 %v1517
    %1573 = vmatprep.subr.mxu0 0.0
    %1574 = vmatpush1.msra.mxu0 %v1516
    %1575 = vmatprep.subr.mxu0 0.0
    %1576 = vmatpush1.msra.mxu0 %v1515
    %1577 = vmatprep.subr.mxu0 0.0
    %1578 = vmatpush1.msra.mxu0 %v1514
    %1579 = vmatprep.subr.mxu0 0.0
    %1580 = vmatpush1.msra.mxu0 %v1513
    %1581 = vmatprep.subr.mxu0 0.0
    %1582 = vmatpush1.msra.mxu0 %v1512
    %1583 = vmatprep.subr.mxu0 0.0
    %1584 = vmatpush2.msra.mxu0 0.0
    %1585 = vmatprep.subr.mxu0 0.0
    %1586 = vmatpush2.msra.mxu0 0.0
    %1587 = vmatprep.subr.mxu0 0.0
    %1588 = vmatpush2.msra.mxu0 0.0
    %1589 = vmatprep.subr.mxu0 0.0
    %1590 = vmatpush2.msra.mxu0 0.0
    %1591 = vmatprep.subr.mxu0 0.0
    %1592 = vmatpush2.msra.mxu0 0.0
    %1593 = vmatprep.subr.mxu0 0.0
    %1594 = vmatpush2.msra.mxu0 0.0
    %1595 = vmatprep.subr.mxu0 0.0
    %1596 = vmatpush2.msra.mxu0 0.0
    %1597 = vmatprep.subr.mxu0 0.0
    %1598 = vmatpush2.msra.mxu0 0.0
    %1599 = vmatprep.subr.mxu0 0.0
    %1600 = vmatpush2.msra.mxu0 0.0
    %1601 = vmatprep.subr.mxu0 0.0
    %1602 = vmatpush2.msra.mxu0 0.0
    %1603 = vmatprep.subr.mxu0 0.0
    %1604 = vmatpush2.msra.mxu0 0.0
    %1605 = vmatprep.subr.mxu0 0.0
    %1606 = vmatpush2.msra.mxu0 0.0
    %1607 = vmatprep.subr.mxu0 0.0
    %1608 = vmatpush2.msra.mxu0 0.0
    %1609 = vmatprep.subr.mxu0 0.0
    %1610 = vmatpush2.msra.mxu0 0.0
    %1611 = vmatprep.subr.mxu0 0.0
    %1612 = vmatpush2.msra.mxu0 0.0
    %1613 = vmatprep.subr.mxu0 0.0
    %1614 = vmatpush2.msra.mxu0 0.0
    %1615 = vmatprep.mubr.f32.mxu0 0.0
    %1616 = vmatmul.mubr.f32.gmra.mxu0 %v1528
    %v1617 = vpop.f32.mrf.mxu0
    %v1618 = vadd.f32 %v1525, %v1617
    %v1619 = vpop.f32.mrf.mxu0
    %1620 = vmatprep.mubr.f32.mxu0 0.0
    %1621 = vmatmul.mubr.f32.gmra.mxu0 %v1531
    %v1622 = vpop.f32.mrf.mxu0
    %v1623 = vadd.f32 %v1525, %v1622
    %v1624 = vpop.f32.mrf.mxu0
    %1625 = vmatprep.mubr.f32.mxu0 0.0
    %1626 = vmatmul.mubr.f32.gmra.mxu0 %v1534
    %v1627 = vpop.f32.mrf.mxu0
    %v1628 = vadd.f32 %v1525, %v1627
    %v1629 = vpop.f32.mrf.mxu0
    %1630 = vmatprep.mubr.f32.mxu0 0.0
    %1631 = vmatmul.mubr.f32.gmra.mxu0 %v1537
    %v1632 = vpop.f32.mrf.mxu0
    %v1633 = vadd.f32 %v1525, %v1632
    %v1634 = vpop.f32.mrf.mxu0
    %1635 = vmatprep.mubr.f32.mxu0 0.0
    %1636 = vmatmul.mubr.f32.gmra.mxu0 %v1540
    %v1637 = vpop.f32.mrf.mxu0
    %v1638 = vadd.f32 %v1525, %v1637
    %v1639 = vpop.f32.mrf.mxu0
    %1640 = vmatprep.mubr.f32.mxu0 0.0
    %1641 = vmatmul.mubr.f32.gmra.mxu0 %v1543
    %v1642 = vpop.f32.mrf.mxu0
    %v1643 = vadd.f32 %v1525, %v1642
    %v1644 = vpop.f32.mrf.mxu0
    %1645 = vmatprep.mubr.f32.mxu0 0.0
    %1646 = vmatmul.mubr.f32.gmra.mxu0 %v1546
    %v1647 = vpop.f32.mrf.mxu0
    %v1648 = vadd.f32 %v1525, %v1647
    %v1649 = vpop.f32.mrf.mxu0
    %1650 = vmatprep.mubr.f32.mxu0 0.0
    %1651 = vmatmul.mubr.f32.gmra.mxu0 %v1549
    %v1652 = vpop.f32.mrf.mxu0
    %v1653 = vadd.f32 %v1525, %v1652
    %v1654 = vpop.f32.mrf.mxu0
    %1655 = vdwg.mxu0
    %v1656 = vsel %vm225, %v1618, 0.0
    %1657 = vadd.xlane.f32.xlu0 %v1656
    %v1658 = vpop.xlane.xlu0 %1657
    %v1659 = vsel %vm225, %v1623, 0.0
    %1660 = vadd.xlane.f32.xlu0 %v1659
    %v1661 = vpop.xlane.xlu0 %1660
    %v1662 = vsel %vm225, %v1628, 0.0
    %1663 = vadd.xlane.f32.xlu0 %v1662
    %v1664 = vpop.xlane.xlu0 %1663
    %v1665 = vsel %vm225, %v1633, 0.0
    %1666 = vadd.xlane.f32.xlu0 %v1665
    %v1667 = vpop.xlane.xlu0 %1666
    %v1668 = vsel %vm225, %v1638, 0.0
    %1669 = vadd.xlane.f32.xlu0 %v1668
    %v1670 = vpop.xlane.xlu0 %1669
    %v1671 = vsel %vm225, %v1643, 0.0
    %1672 = vadd.xlane.f32.xlu0 %v1671
    %v1673 = vpop.xlane.xlu0 %1672
    %v1674 = vsel %vm225, %v1648, 0.0
    %1675 = vadd.xlane.f32.xlu0 %v1674
    %v1676 = vpop.xlane.xlu0 %1675
    %v1677 = vsel %vm225, %v1653, 0.0
    %1678 = vadd.xlane.f32.xlu0 %v1677
    %v1679 = vpop.xlane.xlu0 %1678
    %v1680 = vrcp.pop 64.0
    %v1681 = vmul.f32 %v1658, %v1680
    %v1682 = vmul.f32 %v1661, %v1680
    %v1683 = vmul.f32 %v1664, %v1680
    %v1684 = vmul.f32 %v1667, %v1680
    %v1685 = vmul.f32 %v1670, %v1680
    %v1686 = vmul.f32 %v1673, %v1680
    %v1687 = vmul.f32 %v1676, %v1680
    %v1688 = vmul.f32 %v1679, %v1680
    %v1689 = vsub.f32 %v1618, %v1681
    %v1690 = vsub.f32 %v1623, %v1682
    %v1691 = vsub.f32 %v1628, %v1683
    %v1692 = vsub.f32 %v1633, %v1684
    %v1693 = vsub.f32 %v1638, %v1685
    %v1694 = vsub.f32 %v1643, %v1686
    %v1695 = vsub.f32 %v1648, %v1687
    %v1696 = vsub.f32 %v1653, %v1688
    %v1697 = vmul.f32 %v1689, %v1689
    %v1698 = vmul.f32 %v1690, %v1690
    %v1699 = vmul.f32 %v1691, %v1691
    %v1700 = vmul.f32 %v1692, %v1692
    %v1701 = vmul.f32 %v1693, %v1693
    %v1702 = vmul.f32 %v1694, %v1694
    %v1703 = vmul.f32 %v1695, %v1695
    %v1704 = vmul.f32 %v1696, %v1696
    %v1705 = vsel %vm225, %v1697, 0.0
    %1706 = vadd.xlane.f32.xlu0 %v1705
    %v1707 = vpop.xlane.xlu0 %1706
    %v1708 = vsel %vm225, %v1698, 0.0
    %1709 = vadd.xlane.f32.xlu0 %v1708
    %v1710 = vpop.xlane.xlu0 %1709
    %v1711 = vsel %vm225, %v1699, 0.0
    %1712 = vadd.xlane.f32.xlu0 %v1711
    %v1713 = vpop.xlane.xlu0 %1712
    %v1714 = vsel %vm225, %v1700, 0.0
    %1715 = vadd.xlane.f32.xlu0 %v1714
    %v1716 = vpop.xlane.xlu0 %1715
    %v1717 = vsel %vm225, %v1701, 0.0
    %1718 = vadd.xlane.f32.xlu0 %v1717
    %v1719 = vpop.xlane.xlu0 %1718
    %v1720 = vsel %vm225, %v1702, 0.0
    %1721 = vadd.xlane.f32.xlu0 %v1720
    %v1722 = vpop.xlane.xlu0 %1721
    %v1723 = vsel %vm225, %v1703, 0.0
    %1724 = vadd.xlane.f32.xlu0 %v1723
    %v1725 = vpop.xlane.xlu0 %1724
    %v1726 = vsel %vm225, %v1704, 0.0
    %1727 = vadd.xlane.f32.xlu0 %v1726
    %v1728 = vpop.xlane.xlu0 %1727
    %v1729 = vmul.f32 %v1707, %v1680
    %v1730 = vmul.f32 %v1710, %v1680
    %v1731 = vmul.f32 %v1713, %v1680
    %v1732 = vmul.f32 %v1716, %v1680
    %v1733 = vmul.f32 %v1719, %v1680
    %v1734 = vmul.f32 %v1722, %v1680
    %v1735 = vmul.f32 %v1725, %v1680
    %v1736 = vmul.f32 %v1728, %v1680
    %v1737 = vadd.f32 %v1729, 1e-05
    %v1738 = vadd.f32 %v1730, 1e-05
    %v1739 = vadd.f32 %v1731, 1e-05
    %v1740 = vadd.f32 %v1732, 1e-05
    %v1741 = vadd.f32 %v1733, 1e-05
    %v1742 = vadd.f32 %v1734, 1e-05
    %v1743 = vadd.f32 %v1735, 1e-05
    %v1744 = vadd.f32 %v1736, 1e-05
    %v1745 = vrsqrt.pop %v1737
    %v1746 = vrsqrt.pop %v1738
    %v1747 = vrsqrt.pop %v1739
    %v1748 = vrsqrt.pop %v1740
    %v1749 = vrsqrt.pop %v1741
    %v1750 = vrsqrt.pop %v1742
    %v1751 = vrsqrt.pop %v1743
    %v1752 = vrsqrt.pop %v1744
    %v1753 = vmul.f32 %v1689, %v1745
    %v1754 = vmul.f32 %v1690, %v1746
    %v1755 = vmul.f32 %v1691, %v1747
    %v1756 = vmul.f32 %v1692, %v1748
    %v1757 = vmul.f32 %v1693, %v1749
    %v1758 = vmul.f32 %v1694, %v1750
    %v1759 = vmul.f32 %v1695, %v1751
    %v1760 = vmul.f32 %v1696, %v1752
    %v1761 = vld [vmem:[%s5] sm:$0x1]
    %v1763 = vlaneseq
    %v1764 = vshrl.u32 %v1763, 7
    %v1765 = vsub.s32 0, %v1764
    %v1766 = vrot.slane %v1761, %v1765
    %v1768 = vmul.f32 %v1753, %v1766
    %v1769 = vmul.f32 %v1754, %v1766
    %v1770 = vmul.f32 %v1755, %v1766
    %v1771 = vmul.f32 %v1756, %v1766
    %v1772 = vmul.f32 %v1757, %v1766
    %v1773 = vmul.f32 %v1758, %v1766
    %v1774 = vmul.f32 %v1759, %v1766
    %v1775 = vmul.f32 %v1760, %v1766
    %v1776 = vld [vmem:[%s6] sm:$0x1]
    %v1778 = vlaneseq
    %v1779 = vshrl.u32 %v1778, 7
    %v1780 = vsub.s32 0, %v1779
    %v1781 = vrot.slane %v1776, %v1780
    %v1783 = vadd.f32 %v1768, %v1781
    %v1784 = vadd.f32 %v1769, %v1781
    %v1785 = vadd.f32 %v1770, %v1781
    %v1786 = vadd.f32 %v1771, %v1781
    %v1787 = vadd.f32 %v1772, %v1781
    %v1788 = vadd.f32 %v1773, %v1781
    %v1789 = vadd.f32 %v1774, %v1781
    %v1790 = vadd.f32 %v1775, %v1781
    %v1791 = vmax.f32 %v1783, 0.0
    %v1792 = vmax.f32 %v1784, 0.0
    %v1793 = vmax.f32 %v1785, 0.0
    %v1794 = vmax.f32 %v1786, 0.0
    %v1795 = vmax.f32 %v1787, 0.0
    %v1796 = vmax.f32 %v1788, 0.0
    %v1797 = vmax.f32 %v1789, 0.0
    %v1798 = vmax.f32 %v1790, 0.0
    %v1799 = vld [vmem:[%s7] sm:$0xff]
    %v1800 = vld [vmem:[%s7 + $0x8] sm:$0xff]
    %v1801 = vld [vmem:[%s7 + $0x10] sm:$0xff]
    %v1802 = vld [vmem:[%s7 + $0x18] sm:$0xff]
    %v1803 = vld [vmem:[%s7 + $0x20] sm:$0xff]
    %v1804 = vld [vmem:[%s7 + $0x28] sm:$0xff]
    %v1805 = vld [vmem:[%s7 + $0x30] sm:$0xff]
    %v1806 = vld [vmem:[%s7 + $0x38] sm:$0xff]
    %v1807 = vld [vmem:[%s8] sm:$0x1]
    %v1809 = vlaneseq
    %v1810 = vshrl.u32 %v1809, 7
    %v1811 = vsub.s32 0, %v1810
    %v1812 = vrot.slane %v1807, %v1811
    %v1815 = vsel %vm225, %v1791, 0
    %v1818 = vsel %vm225, %v1792, 0
    %v1821 = vsel %vm225, %v1793, 0
    %v1824 = vsel %vm225, %v1794, 0
    %v1827 = vsel %vm225, %v1795, 0
    %v1830 = vsel %vm225, %v1796, 0
    %v1833 = vsel %vm225, %v1797, 0
    %v1836 = vsel %vm225, %v1798, 0
    %1838 = vmatprep.subr.mxu0 0.0
    %1839 = vmatpush1.msra.mxu0 0.0
    %1840 = vmatprep.subr.mxu0 0.0
    %1841 = vmatpush1.msra.mxu0 0.0
    %1842 = vmatprep.subr.mxu0 0.0
    %1843 = vmatpush1.msra.mxu0 0.0
    %1844 = vmatprep.subr.mxu0 0.0
    %1845 = vmatpush1.msra.mxu0 0.0
    %1846 = vmatprep.subr.mxu0 0.0
    %1847 = vmatpush1.msra.mxu0 0.0
    %1848 = vmatprep.subr.mxu0 0.0
    %1849 = vmatpush1.msra.mxu0 0.0
    %1850 = vmatprep.subr.mxu0 0.0
    %1851 = vmatpush1.msra.mxu0 0.0
    %1852 = vmatprep.subr.mxu0 0.0
    %1853 = vmatpush1.msra.mxu0 0.0
    %1854 = vmatprep.subr.mxu0 0.0
    %1855 = vmatpush1.msra.mxu0 %v1806
    %1856 = vmatprep.subr.mxu0 0.0
    %1857 = vmatpush1.msra.mxu0 %v1805
    %1858 = vmatprep.subr.mxu0 0.0
    %1859 = vmatpush1.msra.mxu0 %v1804
    %1860 = vmatprep.subr.mxu0 0.0
    %1861 = vmatpush1.msra.mxu0 %v1803
    %1862 = vmatprep.subr.mxu0 0.0
    %1863 = vmatpush1.msra.mxu0 %v1802
    %1864 = vmatprep.subr.mxu0 0.0
    %1865 = vmatpush1.msra.mxu0 %v1801
    %1866 = vmatprep.subr.mxu0 0.0
    %1867 = vmatpush1.msra.mxu0 %v1800
    %1868 = vmatprep.subr.mxu0 0.0
    %1869 = vmatpush1.msra.mxu0 %v1799
    %1870 = vmatprep.subr.mxu0 0.0
    %1871 = vmatpush2.msra.mxu0 0.0
    %1872 = vmatprep.subr.mxu0 0.0
    %1873 = vmatpush2.msra.mxu0 0.0
    %1874 = vmatprep.subr.mxu0 0.0
    %1875 = vmatpush2.msra.mxu0 0.0
    %1876 = vmatprep.subr.mxu0 0.0
    %1877 = vmatpush2.msra.mxu0 0.0
    %1878 = vmatprep.subr.mxu0 0.0
    %1879 = vmatpush2.msra.mxu0 0.0
    %1880 = vmatprep.subr.mxu0 0.0
    %1881 = vmatpush2.msra.mxu0 0.0
    %1882 = vmatprep.subr.mxu0 0.0
    %1883 = vmatpush2.msra.mxu0 0.0
    %1884 = vmatprep.subr.mxu0 0.0
    %1885 = vmatpush2.msra.mxu0 0.0
    %1886 = vmatprep.subr.mxu0 0.0
    %1887 = vmatpush2.msra.mxu0 0.0
    %1888 = vmatprep.subr.mxu0 0.0
    %1889 = vmatpush2.msra.mxu0 0.0
    %1890 = vmatprep.subr.mxu0 0.0
    %1891 = vmatpush2.msra.mxu0 0.0
    %1892 = vmatprep.subr.mxu0 0.0
    %1893 = vmatpush2.msra.mxu0 0.0
    %1894 = vmatprep.subr.mxu0 0.0
    %1895 = vmatpush2.msra.mxu0 0.0
    %1896 = vmatprep.subr.mxu0 0.0
    %1897 = vmatpush2.msra.mxu0 0.0
    %1898 = vmatprep.subr.mxu0 0.0
    %1899 = vmatpush2.msra.mxu0 0.0
    %1900 = vmatprep.subr.mxu0 0.0
    %1901 = vmatpush2.msra.mxu0 0.0
    %1902 = vmatprep.mubr.f32.mxu0 0.0
    %1903 = vmatmul.mubr.f32.gmra.mxu0 %v1815
    %v1904 = vpop.f32.mrf.mxu0
    %v1905 = vadd.f32 %v1812, %v1904
    %v1906 = vpop.f32.mrf.mxu0
    %1907 = vmatprep.mubr.f32.mxu0 0.0
    %1908 = vmatmul.mubr.f32.gmra.mxu0 %v1818
    %v1909 = vpop.f32.mrf.mxu0
    %v1910 = vadd.f32 %v1812, %v1909
    %v1911 = vpop.f32.mrf.mxu0
    %1912 = vmatprep.mubr.f32.mxu0 0.0
    %1913 = vmatmul.mubr.f32.gmra.mxu0 %v1821
    %v1914 = vpop.f32.mrf.mxu0
    %v1915 = vadd.f32 %v1812, %v1914
    %v1916 = vpop.f32.mrf.mxu0
    %1917 = vmatprep.mubr.f32.mxu0 0.0
    %1918 = vmatmul.mubr.f32.gmra.mxu0 %v1824
    %v1919 = vpop.f32.mrf.mxu0
    %v1920 = vadd.f32 %v1812, %v1919
    %v1921 = vpop.f32.mrf.mxu0
    %1922 = vmatprep.mubr.f32.mxu0 0.0
    %1923 = vmatmul.mubr.f32.gmra.mxu0 %v1827
    %v1924 = vpop.f32.mrf.mxu0
    %v1925 = vadd.f32 %v1812, %v1924
    %v1926 = vpop.f32.mrf.mxu0
    %1927 = vmatprep.mubr.f32.mxu0 0.0
    %1928 = vmatmul.mubr.f32.gmra.mxu0 %v1830
    %v1929 = vpop.f32.mrf.mxu0
    %v1930 = vadd.f32 %v1812, %v1929
    %v1931 = vpop.f32.mrf.mxu0
    %1932 = vmatprep.mubr.f32.mxu0 0.0
    %1933 = vmatmul.mubr.f32.gmra.mxu0 %v1833
    %v1934 = vpop.f32.mrf.mxu0
    %v1935 = vadd.f32 %v1812, %v1934
    %v1936 = vpop.f32.mrf.mxu0
    %1937 = vmatprep.mubr.f32.mxu0 0.0
    %1938 = vmatmul.mubr.f32.gmra.mxu0 %v1836
    %v1939 = vpop.f32.mrf.mxu0
    %v1940 = vadd.f32 %v1812, %v1939
    %v1941 = vpop.f32.mrf.mxu0
    %1942 = vdwg.mxu0
    %vm1943 = vcmask 31744
    %1944 = vst.msk [vmem:[%s9] sm:$0xff] %vm1943, %v1905
    %1945 = vst.msk [vmem:[%s9 + $0x8] sm:$0xff] %vm1943, %v1910
    %1946 = vst.msk [vmem:[%s9 + $0x10] sm:$0xff] %vm1943, %v1915
    %1947 = vst.msk [vmem:[%s9 + $0x18] sm:$0xff] %vm1943, %v1920
    %1948 = vst.msk [vmem:[%s9 + $0x20] sm:$0xff] %vm1943, %v1925
    %1949 = vst.msk [vmem:[%s9 + $0x28] sm:$0xff] %vm1943, %v1930
    %1950 = vst.msk [vmem:[%s9 + $0x30] sm:$0xff] %vm1943, %v1935
    %1951 = vst.msk [vmem:[%s9 + $0x38] sm:$0xff] %vm1943, %v1940
    // Predicated region
    $region46: #{tpu_custom_call.1} parent=1 // pred_check
      _
    $region47: #{tpu_custom_call.1} parent=1 // pred_check_branch
      %1953 = sbr.rel (0) target = $region49
    $region48: #{tpu_custom_call.1} parent=1 // pred_region
      _
    $region49: #{tpu_custom_call.1} parent=1 // pred_fallthru
      _
    // Predicated region
    $region50: #{tpu_custom_call.1} parent=1 // pred_check
      _
    $region51: #{tpu_custom_call.1} parent=1 // pred_check_branch
      %1955 = sbr.rel (0) target = $region53
    $region52: #{tpu_custom_call.1} parent=1 // pred_region
      _
    $region53: #{tpu_custom_call.1} parent=1 // pred_fallthru
      _
    %1956 = vsyncpa [#allocation3], 1
    %1957 = vsyncpa [#allocation5], 1

</llo_original>
